<compile_context>
chip_gen: v6e
topology: v6e:2x2x1
jax: 0.10.0
libtpu: 0.0.40
codegen_flags: <defaults>
</compile_context>

<pallas_src>
import jax
import jax.numpy as jnp
from jax.experimental import pallas as pl
from jax.experimental.pallas import tpu as pltpu


def _rnn_fc_kernel(x_ref, wih0_ref, whh0_ref, b0_ref, wih1_ref, whh1_ref,
                   b1_ref, wfc_ref, bfc_ref, out_ref):
    """Fused 2-layer tanh RNN + Linear head (single invocation, no grid).

    x_ref:     (T*Bp, D)  bf16, time-major, batch padded to Bp (multiple of 8)
    wih0_ref:  (D, H)     bf16 layer-0 input weights (pre-transposed)
    whh0_ref:  (H, H)     bf16 layer-0 recurrent weights (pre-transposed)
    b0_ref:    (1, H)     f32  layer-0 combined bias (b_ih + b_hh)
    wih1_ref:  (H, H)     bf16 layer-1 input weights (pre-transposed)
    whh1_ref:  (H, H)     bf16 layer-1 recurrent weights (pre-transposed)
    b1_ref:    (1, H)     f32  layer-1 combined bias
    wfc_ref:   (T*H, Cp)  bf16 FC weight, lane-padded to Cp (multiple of 128)
    bfc_ref:   (1, Cp)    f32  FC bias (lane-padded)
    out_ref:   (Bp, Cp)   f32  padded logits
    """
    Bp = out_ref.shape[0]
    T = x_ref.shape[0] // Bp
    H = whh0_ref.shape[0]

    # Layer-0 input projection for ALL timesteps in a single MXU op, bias
    # folded in.  Removes T tiny matmuls from the recurrent loop.
    xp = jnp.dot(x_ref[...], wih0_ref[...],
                 preferred_element_type=jnp.float32) + b0_ref[...]     # (T*Bp, H)

    # Hoisted loop-invariant weight loads (1-2 vregs each -> one vld, not T).
    whh0 = whh0_ref[...]
    wih1 = wih1_ref[...]
    whh1 = whh1_ref[...]
    # Hoisted bias broadcast (broadcast_in_dim is not CSE'd inside loops).
    b1b = jnp.broadcast_to(b1_ref[...], (Bp, H))

    h0 = jnp.zeros((Bp, H), jnp.float32)
    h1 = jnp.zeros((Bp, H), jnp.float32)
    # Incremental FC accumulator, initialized with the bias (1 f32 vreg).
    logits = jnp.broadcast_to(bfc_ref[...], out_ref.shape)             # (Bp, Cp)

    # T is a small static trip count: fully unroll so the LLO scheduler sees
    # the whole dependent chain, can overlap layer-1(t) with layer-0(t+1),
    # and every slice offset below is static.
    for t in range(T):
        # Layer 0: only the recurrent matmul remains on the dependent chain.
        a0 = xp[t * Bp:(t + 1) * Bp, :] + jnp.dot(
            h0.astype(jnp.bfloat16), whh0, preferred_element_type=jnp.float32)
        h0 = jnp.tanh(a0)                        # f32 elementwise (v5e-safe)

        # Layer 1: two independent MXU pushes + VPU add (no lane concat).
        a1 = (b1b
              + jnp.dot(h0.astype(jnp.bfloat16), wih1,
                        preferred_element_type=jnp.float32)
              + jnp.dot(h1.astype(jnp.bfloat16), whh1,
                        preferred_element_type=jnp.float32))
        h1 = jnp.tanh(a1)

        # Incremental FC contraction: off the critical recurrence path, uses
        # MXU slack, removes the h_all scratch + epilogue-serialized dot.
        logits = logits + jnp.dot(
            h1.astype(jnp.bfloat16), wfc_ref[t * H:(t + 1) * H, :],
            preferred_element_type=jnp.float32)

    # One lane-dense (Bp, Cp) store.
    out_ref[...] = logits


def rnn_forward(x, params):
    """x: (B, T, D) batch-first float32 (same convention as the PyTorch module)."""
    B, T, D = x.shape
    H = params["w_hh0"].shape[0]
    C = params["w_fc"].shape[0]
    Bp = max(8, ((B + 7) // 8) * 8)   # pad batch to the 8-sublane tile
    Cp = ((C + 127) // 128) * 128     # pad FC output to a lane-dense 128 multiple
    # NOTE: for a real MNIST batch (B >= 100) keep Bp as one tile that fills
    # MXU rows (128 on v5e, up to 256 on v6e/v7x) before tiling batch smaller:
    # chain latency is ~identical for M=8 and M=128, so bigger M is nearly
    # free throughput.  On v7x at scaled-up shapes, add a batch grid axis
    # marked "parallel" (or core_map) to use both TensorCores and re-budget
    # any resident buffers against 64 MiB/TC.

    # Time-major, batch-padded, flattened to (T*Bp, D); bf16 MXU operand.
    x_tm = jnp.transpose(x, (1, 0, 2)).astype(jnp.float32)              # (T, B, D)
    x_tm = jnp.pad(x_tm, ((0, 0), (0, Bp - B), (0, 0)))                 # zero rows
    x2d = x_tm.reshape(T * Bp, D).astype(jnp.bfloat16)

    wih0 = params["w_ih0"].T.astype(jnp.bfloat16)                       # (D, H)
    whh0 = params["w_hh0"].T.astype(jnp.bfloat16)                       # (H, H)
    b0 = (params["b_ih0"] + params["b_hh0"]).reshape(1, H).astype(jnp.float32)
    wih1 = params["w_ih1"].T.astype(jnp.bfloat16)                       # (H, H)
    whh1 = params["w_hh1"].T.astype(jnp.bfloat16)                       # (H, H)
    b1 = (params["b_ih1"] + params["b_hh1"]).reshape(1, H).astype(jnp.float32)
    wfc = jnp.pad(params["w_fc"].T,
                  ((0, 0), (0, Cp - C))).astype(jnp.bfloat16)           # (T*H, Cp)
    bfc = jnp.pad(params["b_fc"], (0, Cp - C)).reshape(1, Cp).astype(jnp.float32)

    # Advisory cost hint so XLA overlaps the wrapper transpose/pad/casts.
    flops = 2 * T * Bp * (D * H + 3 * H * H + H * Cp)
    bytes_accessed = int(
        x2d.size * 2 + wih0.size * 2 + whh0.size * 2 + b0.size * 4
        + wih1.size * 2 + whh1.size * 2 + b1.size * 4
        + wfc.size * 2 + bfc.size * 4 + Bp * Cp * 4)
    cost = pl.CostEstimate(flops=flops,
                           transcendentals=2 * T * Bp * H,
                           bytes_accessed=bytes_accessed)

    vmem = pl.BlockSpec(memory_space=pltpu.MemorySpace.VMEM)
    out = pl.pallas_call(
        _rnn_fc_kernel,
        out_shape=jax.ShapeDtypeStruct((Bp, Cp), jnp.float32),
        in_specs=[vmem] * 9,
        out_specs=vmem,
        cost_estimate=cost,
        # Everything resident is a few hundred KiB -> fits every generation's
        # scoped VMEM budget.  If T/H/C grow, stream x and wfc over a T grid
        # axis (BlockSpec index_map over t, dimension_semantics ("arbitrary",))
        # instead of keeping them fully resident.
    )(x2d, wih0, whh0, b0, wih1, whh1, b1, wfc, bfc)
    return out[:B, :C]


def rnn_reference(x, params):
    """Pure-JAX f32 reference mirroring the PyTorch forward pass exactly."""
    B, T, _ = x.shape
    H = params["w_hh0"].shape[0]
    h0 = jnp.zeros((B, H), jnp.float32)
    h1 = jnp.zeros((B, H), jnp.float32)
    outs = []
    for t in range(T):
        h0 = jnp.tanh(x[:, t, :] @ params["w_ih0"].T + params["b_ih0"]
                      + h0 @ params["w_hh0"].T + params["b_hh0"])
        h1 = jnp.tanh(h0 @ params["w_ih1"].T + params["b_ih1"]
                      + h1 @ params["w_hh1"].T + params["b_hh1"])
        outs.append(h1)
    flat = jnp.stack(outs, axis=1).reshape(B, -1)                       # (B, T*H)
    return flat @ params["w_fc"].T + params["b_fc"]


def init_params(key, input_size, hidden_size, seq_len, num_classes):
    """Deterministic init matching nn.RNN / nn.Linear shapes (uniform +-1/sqrt(fan))."""
    ks = jax.random.split(key, 10)
    s_rnn = 1.0 / jnp.sqrt(hidden_size)
    s_fc = 1.0 / jnp.sqrt(hidden_size * seq_len)
    u = lambda k, shape, s: jax.random.uniform(k, shape, jnp.float32, -s, s)
    return {
        # layer 0
        "w_ih0": u(ks[0], (hidden_size, input_size), s_rnn),
        "w_hh0": u(ks[1], (hidden_size, hidden_size), s_rnn),
        "b_ih0": u(ks[2], (hidden_size,), s_rnn),
        "b_hh0": u(ks[3], (hidden_size,), s_rnn),
        # layer 1
        "w_ih1": u(ks[4], (hidden_size, hidden_size), s_rnn),
        "w_hh1": u(ks[5], (hidden_size, hidden_size), s_rnn),
        "b_ih1": u(ks[6], (hidden_size,), s_rnn),
        "b_hh1": u(ks[7], (hidden_size,), s_rnn),
        # fc
        "w_fc": u(ks[8], (num_classes, hidden_size * seq_len), s_fc),
        "b_fc": u(ks[9], (num_classes,), s_fc),
    }


if __name__ == "__main__":
    # Small shapes consistent with the module's forward: x is (B, seq_len, input_size).
    B, T, D, H, C = 2, 8, 16, 32, 10

    key = jax.random.PRNGKey(0)
    kx, kp = jax.random.split(key)
    x = jax.random.normal(kx, (B, T, D), jnp.float32)
    params = init_params(kp, D, H, T, C)

    out = jax.block_until_ready(rnn_forward(x, params))
    ref = rnn_reference(x, params)

    assert out.shape == (B, C)
    # bf16 MXU operands (f32 accumulation) vs. a pure-f32 reference.
    # TODO(synk): re-check tolerance / keep recurrent matmuls in f32 if T or H
    # grow (bf16 rounding compounds through the recurrence).
    assert jnp.allclose(out, ref, atol=2e-2, rtol=2e-2), "mismatch vs JAX reference"

    print("KERNEL_OK")
</pallas_src>

<mosaic_0001>
module attributes {stable_mosaic.version = 11 : i64} {
  func.func @_rnn_fc_kernel(%arg0: memref<64x16xbf16, #tpu.memory_space<vmem>>, %arg1: memref<16x32xbf16, #tpu.memory_space<vmem>>, %arg2: memref<32x32xbf16, #tpu.memory_space<vmem>>, %arg3: memref<1x32xf32, #tpu.memory_space<vmem>>, %arg4: memref<32x32xbf16, #tpu.memory_space<vmem>>, %arg5: memref<32x32xbf16, #tpu.memory_space<vmem>>, %arg6: memref<1x32xf32, #tpu.memory_space<vmem>>, %arg7: memref<256x128xbf16, #tpu.memory_space<vmem>>, %arg8: memref<1x128xf32, #tpu.memory_space<vmem>>, %arg9: memref<8x128xf32, #tpu.memory_space<vmem>>) attributes {dimension_semantics = [], scalar_prefetch = 0 : i64, scratch_operands = 0 : i64, tpu.core_type = #tpu.core_type<tc>} {
    %c0 = arith.constant 0 : index
    %c0_0 = arith.constant 0 : index
    %0 = vector.load %arg0[%c0, %c0_0] : memref<64x16xbf16, #tpu.memory_space<vmem>>, vector<64x16xbf16>
    %c0_1 = arith.constant 0 : index
    %c0_2 = arith.constant 0 : index
    %1 = vector.load %arg1[%c0_1, %c0_2] : memref<16x32xbf16, #tpu.memory_space<vmem>>, vector<16x32xbf16>
    %cst = arith.constant dense<0.000000e+00> : vector<64x32xf32>
    %2 = tpu.matmul %0, %1, %cst {dimension_numbers = #tpu.dot_dimension_numbers<[1], [0], [0], [1], [0, 0, 1, 1], [], []>} : vector<64x16xbf16>, vector<16x32xbf16>, vector<64x32xf32> -> vector<64x32xf32>
    %c0_3 = arith.constant 0 : index
    %c0_4 = arith.constant 0 : index
    %3 = vector.load %arg3[%c0_3, %c0_4] : memref<1x32xf32, #tpu.memory_space<vmem>>, vector<1x32xf32>
    %4 = vector.broadcast %3 : vector<1x32xf32> to vector<64x32xf32>
    %5 = arith.addf %2, %4 : vector<64x32xf32>
    %c0_5 = arith.constant 0 : index
    %c0_6 = arith.constant 0 : index
    %6 = vector.load %arg2[%c0_5, %c0_6] : memref<32x32xbf16, #tpu.memory_space<vmem>>, vector<32x32xbf16>
    %c0_7 = arith.constant 0 : index
    %c0_8 = arith.constant 0 : index
    %7 = vector.load %arg4[%c0_7, %c0_8] : memref<32x32xbf16, #tpu.memory_space<vmem>>, vector<32x32xbf16>
    %c0_9 = arith.constant 0 : index
    %c0_10 = arith.constant 0 : index
    %8 = vector.load %arg5[%c0_9, %c0_10] : memref<32x32xbf16, #tpu.memory_space<vmem>>, vector<32x32xbf16>
    %c0_11 = arith.constant 0 : index
    %c0_12 = arith.constant 0 : index
    %9 = vector.load %arg6[%c0_11, %c0_12] : memref<1x32xf32, #tpu.memory_space<vmem>>, vector<1x32xf32>
    %10 = vector.shape_cast %9 : vector<1x32xf32> to vector<1x32xf32>
    %11 = vector.broadcast %10 : vector<1x32xf32> to vector<8x32xf32>
    %cst_13 = arith.constant 0.000000e+00 : f32
    %12 = vector.broadcast %cst_13 : f32 to vector<8x32xf32>
    %cst_14 = arith.constant 0.000000e+00 : f32
    %13 = vector.broadcast %cst_14 : f32 to vector<8x32xf32>
    %c0_15 = arith.constant 0 : index
    %c0_16 = arith.constant 0 : index
    %14 = vector.load %arg8[%c0_15, %c0_16] : memref<1x128xf32, #tpu.memory_space<vmem>>, vector<1x128xf32>
    %15 = vector.shape_cast %14 : vector<1x128xf32> to vector<1x128xf32>
    %16 = vector.broadcast %15 : vector<1x128xf32> to vector<8x128xf32>
    %17 = vector.extract_strided_slice %5 {offsets = [0, 0], sizes = [8, 32], strides = [1, 1]} : vector<64x32xf32> to vector<8x32xf32>
    %18 = arith.truncf %12 : vector<8x32xf32> to vector<8x32xbf16>
    %cst_17 = arith.constant dense<0.000000e+00> : vector<8x32xf32>
    %19 = tpu.matmul %18, %6, %cst_17 {dimension_numbers = #tpu.dot_dimension_numbers<[1], [0], [0], [1], [0, 0, 1, 1], [], []>} : vector<8x32xbf16>, vector<32x32xbf16>, vector<8x32xf32> -> vector<8x32xf32>
    %20 = arith.addf %17, %19 : vector<8x32xf32>
    %21 = math.tanh %20 : vector<8x32xf32>
    %22 = arith.truncf %21 : vector<8x32xf32> to vector<8x32xbf16>
    %cst_18 = arith.constant dense<0.000000e+00> : vector<8x32xf32>
    %23 = tpu.matmul %22, %7, %cst_18 {dimension_numbers = #tpu.dot_dimension_numbers<[1], [0], [0], [1], [0, 0, 1, 1], [], []>} : vector<8x32xbf16>, vector<32x32xbf16>, vector<8x32xf32> -> vector<8x32xf32>
    %24 = arith.addf %11, %23 : vector<8x32xf32>
    %25 = arith.truncf %13 : vector<8x32xf32> to vector<8x32xbf16>
    %cst_19 = arith.constant dense<0.000000e+00> : vector<8x32xf32>
    %26 = tpu.matmul %25, %8, %cst_19 {dimension_numbers = #tpu.dot_dimension_numbers<[1], [0], [0], [1], [0, 0, 1, 1], [], []>} : vector<8x32xbf16>, vector<32x32xbf16>, vector<8x32xf32> -> vector<8x32xf32>
    %27 = arith.addf %24, %26 : vector<8x32xf32>
    %28 = math.tanh %27 : vector<8x32xf32>
    %29 = arith.truncf %28 : vector<8x32xf32> to vector<8x32xbf16>
    %c0_20 = arith.constant 0 : index
    %c0_21 = arith.constant 0 : index
    %30 = vector.load %arg7[%c0_20, %c0_21] : memref<256x128xbf16, #tpu.memory_space<vmem>>, vector<32x128xbf16>
    %cst_22 = arith.constant dense<0.000000e+00> : vector<8x128xf32>
    %31 = tpu.matmul %29, %30, %cst_22 {dimension_numbers = #tpu.dot_dimension_numbers<[1], [0], [0], [1], [0, 0, 1, 1], [], []>} : vector<8x32xbf16>, vector<32x128xbf16>, vector<8x128xf32> -> vector<8x128xf32>
    %32 = arith.addf %16, %31 : vector<8x128xf32>
    %33 = vector.extract_strided_slice %5 {offsets = [8, 0], sizes = [8, 32], strides = [1, 1]} : vector<64x32xf32> to vector<8x32xf32>
    %34 = arith.truncf %21 : vector<8x32xf32> to vector<8x32xbf16>
    %cst_23 = arith.constant dense<0.000000e+00> : vector<8x32xf32>
    %35 = tpu.matmul %34, %6, %cst_23 {dimension_numbers = #tpu.dot_dimension_numbers<[1], [0], [0], [1], [0, 0, 1, 1], [], []>} : vector<8x32xbf16>, vector<32x32xbf16>, vector<8x32xf32> -> vector<8x32xf32>
    %36 = arith.addf %33, %35 : vector<8x32xf32>
    %37 = math.tanh %36 : vector<8x32xf32>
    %38 = arith.truncf %37 : vector<8x32xf32> to vector<8x32xbf16>
    %cst_24 = arith.constant dense<0.000000e+00> : vector<8x32xf32>
    %39 = tpu.matmul %38, %7, %cst_24 {dimension_numbers = #tpu.dot_dimension_numbers<[1], [0], [0], [1], [0, 0, 1, 1], [], []>} : vector<8x32xbf16>, vector<32x32xbf16>, vector<8x32xf32> -> vector<8x32xf32>
    %40 = arith.addf %11, %39 : vector<8x32xf32>
    %41 = arith.truncf %28 : vector<8x32xf32> to vector<8x32xbf16>
    %cst_25 = arith.constant dense<0.000000e+00> : vector<8x32xf32>
    %42 = tpu.matmul %41, %8, %cst_25 {dimension_numbers = #tpu.dot_dimension_numbers<[1], [0], [0], [1], [0, 0, 1, 1], [], []>} : vector<8x32xbf16>, vector<32x32xbf16>, vector<8x32xf32> -> vector<8x32xf32>
    %43 = arith.addf %40, %42 : vector<8x32xf32>
    %44 = math.tanh %43 : vector<8x32xf32>
    %45 = arith.truncf %44 : vector<8x32xf32> to vector<8x32xbf16>
    %c32 = arith.constant 32 : index
    %c0_26 = arith.constant 0 : index
    %46 = vector.load %arg7[%c32, %c0_26] : memref<256x128xbf16, #tpu.memory_space<vmem>>, vector<32x128xbf16>
    %cst_27 = arith.constant dense<0.000000e+00> : vector<8x128xf32>
    %47 = tpu.matmul %45, %46, %cst_27 {dimension_numbers = #tpu.dot_dimension_numbers<[1], [0], [0], [1], [0, 0, 1, 1], [], []>} : vector<8x32xbf16>, vector<32x128xbf16>, vector<8x128xf32> -> vector<8x128xf32>
    %48 = arith.addf %32, %47 : vector<8x128xf32>
    %49 = vector.extract_strided_slice %5 {offsets = [16, 0], sizes = [8, 32], strides = [1, 1]} : vector<64x32xf32> to vector<8x32xf32>
    %50 = arith.truncf %37 : vector<8x32xf32> to vector<8x32xbf16>
    %cst_28 = arith.constant dense<0.000000e+00> : vector<8x32xf32>
    %51 = tpu.matmul %50, %6, %cst_28 {dimension_numbers = #tpu.dot_dimension_numbers<[1], [0], [0], [1], [0, 0, 1, 1], [], []>} : vector<8x32xbf16>, vector<32x32xbf16>, vector<8x32xf32> -> vector<8x32xf32>
    %52 = arith.addf %49, %51 : vector<8x32xf32>
    %53 = math.tanh %52 : vector<8x32xf32>
    %54 = arith.truncf %53 : vector<8x32xf32> to vector<8x32xbf16>
    %cst_29 = arith.constant dense<0.000000e+00> : vector<8x32xf32>
    %55 = tpu.matmul %54, %7, %cst_29 {dimension_numbers = #tpu.dot_dimension_numbers<[1], [0], [0], [1], [0, 0, 1, 1], [], []>} : vector<8x32xbf16>, vector<32x32xbf16>, vector<8x32xf32> -> vector<8x32xf32>
    %56 = arith.addf %11, %55 : vector<8x32xf32>
    %57 = arith.truncf %44 : vector<8x32xf32> to vector<8x32xbf16>
    %cst_30 = arith.constant dense<0.000000e+00> : vector<8x32xf32>
    %58 = tpu.matmul %57, %8, %cst_30 {dimension_numbers = #tpu.dot_dimension_numbers<[1], [0], [0], [1], [0, 0, 1, 1], [], []>} : vector<8x32xbf16>, vector<32x32xbf16>, vector<8x32xf32> -> vector<8x32xf32>
    %59 = arith.addf %56, %58 : vector<8x32xf32>
    %60 = math.tanh %59 : vector<8x32xf32>
    %61 = arith.truncf %60 : vector<8x32xf32> to vector<8x32xbf16>
    %c64 = arith.constant 64 : index
    %c0_31 = arith.constant 0 : index
    %62 = vector.load %arg7[%c64, %c0_31] : memref<256x128xbf16, #tpu.memory_space<vmem>>, vector<32x128xbf16>
    %cst_32 = arith.constant dense<0.000000e+00> : vector<8x128xf32>
    %63 = tpu.matmul %61, %62, %cst_32 {dimension_numbers = #tpu.dot_dimension_numbers<[1], [0], [0], [1], [0, 0, 1, 1], [], []>} : vector<8x32xbf16>, vector<32x128xbf16>, vector<8x128xf32> -> vector<8x128xf32>
    %64 = arith.addf %48, %63 : vector<8x128xf32>
    %65 = vector.extract_strided_slice %5 {offsets = [24, 0], sizes = [8, 32], strides = [1, 1]} : vector<64x32xf32> to vector<8x32xf32>
    %66 = arith.truncf %53 : vector<8x32xf32> to vector<8x32xbf16>
    %cst_33 = arith.constant dense<0.000000e+00> : vector<8x32xf32>
    %67 = tpu.matmul %66, %6, %cst_33 {dimension_numbers = #tpu.dot_dimension_numbers<[1], [0], [0], [1], [0, 0, 1, 1], [], []>} : vector<8x32xbf16>, vector<32x32xbf16>, vector<8x32xf32> -> vector<8x32xf32>
    %68 = arith.addf %65, %67 : vector<8x32xf32>
    %69 = math.tanh %68 : vector<8x32xf32>
    %70 = arith.truncf %69 : vector<8x32xf32> to vector<8x32xbf16>
    %cst_34 = arith.constant dense<0.000000e+00> : vector<8x32xf32>
    %71 = tpu.matmul %70, %7, %cst_34 {dimension_numbers = #tpu.dot_dimension_numbers<[1], [0], [0], [1], [0, 0, 1, 1], [], []>} : vector<8x32xbf16>, vector<32x32xbf16>, vector<8x32xf32> -> vector<8x32xf32>
    %72 = arith.addf %11, %71 : vector<8x32xf32>
    %73 = arith.truncf %60 : vector<8x32xf32> to vector<8x32xbf16>
    %cst_35 = arith.constant dense<0.000000e+00> : vector<8x32xf32>
    %74 = tpu.matmul %73, %8, %cst_35 {dimension_numbers = #tpu.dot_dimension_numbers<[1], [0], [0], [1], [0, 0, 1, 1], [], []>} : vector<8x32xbf16>, vector<32x32xbf16>, vector<8x32xf32> -> vector<8x32xf32>
    %75 = arith.addf %72, %74 : vector<8x32xf32>
    %76 = math.tanh %75 : vector<8x32xf32>
    %77 = arith.truncf %76 : vector<8x32xf32> to vector<8x32xbf16>
    %c96 = arith.constant 96 : index
    %c0_36 = arith.constant 0 : index
    %78 = vector.load %arg7[%c96, %c0_36] : memref<256x128xbf16, #tpu.memory_space<vmem>>, vector<32x128xbf16>
    %cst_37 = arith.constant dense<0.000000e+00> : vector<8x128xf32>
    %79 = tpu.matmul %77, %78, %cst_37 {dimension_numbers = #tpu.dot_dimension_numbers<[1], [0], [0], [1], [0, 0, 1, 1], [], []>} : vector<8x32xbf16>, vector<32x128xbf16>, vector<8x128xf32> -> vector<8x128xf32>
    %80 = arith.addf %64, %79 : vector<8x128xf32>
    %81 = vector.extract_strided_slice %5 {offsets = [32, 0], sizes = [8, 32], strides = [1, 1]} : vector<64x32xf32> to vector<8x32xf32>
    %82 = arith.truncf %69 : vector<8x32xf32> to vector<8x32xbf16>
    %cst_38 = arith.constant dense<0.000000e+00> : vector<8x32xf32>
    %83 = tpu.matmul %82, %6, %cst_38 {dimension_numbers = #tpu.dot_dimension_numbers<[1], [0], [0], [1], [0, 0, 1, 1], [], []>} : vector<8x32xbf16>, vector<32x32xbf16>, vector<8x32xf32> -> vector<8x32xf32>
    %84 = arith.addf %81, %83 : vector<8x32xf32>
    %85 = math.tanh %84 : vector<8x32xf32>
    %86 = arith.truncf %85 : vector<8x32xf32> to vector<8x32xbf16>
    %cst_39 = arith.constant dense<0.000000e+00> : vector<8x32xf32>
    %87 = tpu.matmul %86, %7, %cst_39 {dimension_numbers = #tpu.dot_dimension_numbers<[1], [0], [0], [1], [0, 0, 1, 1], [], []>} : vector<8x32xbf16>, vector<32x32xbf16>, vector<8x32xf32> -> vector<8x32xf32>
    %88 = arith.addf %11, %87 : vector<8x32xf32>
    %89 = arith.truncf %76 : vector<8x32xf32> to vector<8x32xbf16>
    %cst_40 = arith.constant dense<0.000000e+00> : vector<8x32xf32>
    %90 = tpu.matmul %89, %8, %cst_40 {dimension_numbers = #tpu.dot_dimension_numbers<[1], [0], [0], [1], [0, 0, 1, 1], [], []>} : vector<8x32xbf16>, vector<32x32xbf16>, vector<8x32xf32> -> vector<8x32xf32>
    %91 = arith.addf %88, %90 : vector<8x32xf32>
    %92 = math.tanh %91 : vector<8x32xf32>
    %93 = arith.truncf %92 : vector<8x32xf32> to vector<8x32xbf16>
    %c128 = arith.constant 128 : index
    %c0_41 = arith.constant 0 : index
    %94 = vector.load %arg7[%c128, %c0_41] : memref<256x128xbf16, #tpu.memory_space<vmem>>, vector<32x128xbf16>
    %cst_42 = arith.constant dense<0.000000e+00> : vector<8x128xf32>
    %95 = tpu.matmul %93, %94, %cst_42 {dimension_numbers = #tpu.dot_dimension_numbers<[1], [0], [0], [1], [0, 0, 1, 1], [], []>} : vector<8x32xbf16>, vector<32x128xbf16>, vector<8x128xf32> -> vector<8x128xf32>
    %96 = arith.addf %80, %95 : vector<8x128xf32>
    %97 = vector.extract_strided_slice %5 {offsets = [40, 0], sizes = [8, 32], strides = [1, 1]} : vector<64x32xf32> to vector<8x32xf32>
    %98 = arith.truncf %85 : vector<8x32xf32> to vector<8x32xbf16>
    %cst_43 = arith.constant dense<0.000000e+00> : vector<8x32xf32>
    %99 = tpu.matmul %98, %6, %cst_43 {dimension_numbers = #tpu.dot_dimension_numbers<[1], [0], [0], [1], [0, 0, 1, 1], [], []>} : vector<8x32xbf16>, vector<32x32xbf16>, vector<8x32xf32> -> vector<8x32xf32>
    %100 = arith.addf %97, %99 : vector<8x32xf32>
    %101 = math.tanh %100 : vector<8x32xf32>
    %102 = arith.truncf %101 : vector<8x32xf32> to vector<8x32xbf16>
    %cst_44 = arith.constant dense<0.000000e+00> : vector<8x32xf32>
    %103 = tpu.matmul %102, %7, %cst_44 {dimension_numbers = #tpu.dot_dimension_numbers<[1], [0], [0], [1], [0, 0, 1, 1], [], []>} : vector<8x32xbf16>, vector<32x32xbf16>, vector<8x32xf32> -> vector<8x32xf32>
    %104 = arith.addf %11, %103 : vector<8x32xf32>
    %105 = arith.truncf %92 : vector<8x32xf32> to vector<8x32xbf16>
    %cst_45 = arith.constant dense<0.000000e+00> : vector<8x32xf32>
    %106 = tpu.matmul %105, %8, %cst_45 {dimension_numbers = #tpu.dot_dimension_numbers<[1], [0], [0], [1], [0, 0, 1, 1], [], []>} : vector<8x32xbf16>, vector<32x32xbf16>, vector<8x32xf32> -> vector<8x32xf32>
    %107 = arith.addf %104, %106 : vector<8x32xf32>
    %108 = math.tanh %107 : vector<8x32xf32>
    %109 = arith.truncf %108 : vector<8x32xf32> to vector<8x32xbf16>
    %c160 = arith.constant 160 : index
    %c0_46 = arith.constant 0 : index
    %110 = vector.load %arg7[%c160, %c0_46] : memref<256x128xbf16, #tpu.memory_space<vmem>>, vector<32x128xbf16>
    %cst_47 = arith.constant dense<0.000000e+00> : vector<8x128xf32>
    %111 = tpu.matmul %109, %110, %cst_47 {dimension_numbers = #tpu.dot_dimension_numbers<[1], [0], [0], [1], [0, 0, 1, 1], [], []>} : vector<8x32xbf16>, vector<32x128xbf16>, vector<8x128xf32> -> vector<8x128xf32>
    %112 = arith.addf %96, %111 : vector<8x128xf32>
    %113 = vector.extract_strided_slice %5 {offsets = [48, 0], sizes = [8, 32], strides = [1, 1]} : vector<64x32xf32> to vector<8x32xf32>
    %114 = arith.truncf %101 : vector<8x32xf32> to vector<8x32xbf16>
    %cst_48 = arith.constant dense<0.000000e+00> : vector<8x32xf32>
    %115 = tpu.matmul %114, %6, %cst_48 {dimension_numbers = #tpu.dot_dimension_numbers<[1], [0], [0], [1], [0, 0, 1, 1], [], []>} : vector<8x32xbf16>, vector<32x32xbf16>, vector<8x32xf32> -> vector<8x32xf32>
    %116 = arith.addf %113, %115 : vector<8x32xf32>
    %117 = math.tanh %116 : vector<8x32xf32>
    %118 = arith.truncf %117 : vector<8x32xf32> to vector<8x32xbf16>
    %cst_49 = arith.constant dense<0.000000e+00> : vector<8x32xf32>
    %119 = tpu.matmul %118, %7, %cst_49 {dimension_numbers = #tpu.dot_dimension_numbers<[1], [0], [0], [1], [0, 0, 1, 1], [], []>} : vector<8x32xbf16>, vector<32x32xbf16>, vector<8x32xf32> -> vector<8x32xf32>
    %120 = arith.addf %11, %119 : vector<8x32xf32>
    %121 = arith.truncf %108 : vector<8x32xf32> to vector<8x32xbf16>
    %cst_50 = arith.constant dense<0.000000e+00> : vector<8x32xf32>
    %122 = tpu.matmul %121, %8, %cst_50 {dimension_numbers = #tpu.dot_dimension_numbers<[1], [0], [0], [1], [0, 0, 1, 1], [], []>} : vector<8x32xbf16>, vector<32x32xbf16>, vector<8x32xf32> -> vector<8x32xf32>
    %123 = arith.addf %120, %122 : vector<8x32xf32>
    %124 = math.tanh %123 : vector<8x32xf32>
    %125 = arith.truncf %124 : vector<8x32xf32> to vector<8x32xbf16>
    %c192 = arith.constant 192 : index
    %c0_51 = arith.constant 0 : index
    %126 = vector.load %arg7[%c192, %c0_51] : memref<256x128xbf16, #tpu.memory_space<vmem>>, vector<32x128xbf16>
    %cst_52 = arith.constant dense<0.000000e+00> : vector<8x128xf32>
    %127 = tpu.matmul %125, %126, %cst_52 {dimension_numbers = #tpu.dot_dimension_numbers<[1], [0], [0], [1], [0, 0, 1, 1], [], []>} : vector<8x32xbf16>, vector<32x128xbf16>, vector<8x128xf32> -> vector<8x128xf32>
    %128 = arith.addf %112, %127 : vector<8x128xf32>
    %129 = vector.extract_strided_slice %5 {offsets = [56, 0], sizes = [8, 32], strides = [1, 1]} : vector<64x32xf32> to vector<8x32xf32>
    %130 = arith.truncf %117 : vector<8x32xf32> to vector<8x32xbf16>
    %cst_53 = arith.constant dense<0.000000e+00> : vector<8x32xf32>
    %131 = tpu.matmul %130, %6, %cst_53 {dimension_numbers = #tpu.dot_dimension_numbers<[1], [0], [0], [1], [0, 0, 1, 1], [], []>} : vector<8x32xbf16>, vector<32x32xbf16>, vector<8x32xf32> -> vector<8x32xf32>
    %132 = arith.addf %129, %131 : vector<8x32xf32>
    %133 = math.tanh %132 : vector<8x32xf32>
    %134 = arith.truncf %133 : vector<8x32xf32> to vector<8x32xbf16>
    %cst_54 = arith.constant dense<0.000000e+00> : vector<8x32xf32>
    %135 = tpu.matmul %134, %7, %cst_54 {dimension_numbers = #tpu.dot_dimension_numbers<[1], [0], [0], [1], [0, 0, 1, 1], [], []>} : vector<8x32xbf16>, vector<32x32xbf16>, vector<8x32xf32> -> vector<8x32xf32>
    %136 = arith.addf %11, %135 : vector<8x32xf32>
    %137 = arith.truncf %124 : vector<8x32xf32> to vector<8x32xbf16>
    %cst_55 = arith.constant dense<0.000000e+00> : vector<8x32xf32>
    %138 = tpu.matmul %137, %8, %cst_55 {dimension_numbers = #tpu.dot_dimension_numbers<[1], [0], [0], [1], [0, 0, 1, 1], [], []>} : vector<8x32xbf16>, vector<32x32xbf16>, vector<8x32xf32> -> vector<8x32xf32>
    %139 = arith.addf %136, %138 : vector<8x32xf32>
    %140 = math.tanh %139 : vector<8x32xf32>
    %141 = arith.truncf %140 : vector<8x32xf32> to vector<8x32xbf16>
    %c224 = arith.constant 224 : index
    %c0_56 = arith.constant 0 : index
    %142 = vector.load %arg7[%c224, %c0_56] : memref<256x128xbf16, #tpu.memory_space<vmem>>, vector<32x128xbf16>
    %cst_57 = arith.constant dense<0.000000e+00> : vector<8x128xf32>
    %143 = tpu.matmul %141, %142, %cst_57 {dimension_numbers = #tpu.dot_dimension_numbers<[1], [0], [0], [1], [0, 0, 1, 1], [], []>} : vector<8x32xbf16>, vector<32x128xbf16>, vector<8x128xf32> -> vector<8x128xf32>
    %144 = arith.addf %128, %143 : vector<8x128xf32>
    %c0_58 = arith.constant 0 : index
    %c0_59 = arith.constant 0 : index
    %145 = vector.load %arg9[%c0_58, %c0_59] : memref<8x128xf32, #tpu.memory_space<vmem>>, vector<8x128xf32>
    tpu.vector_store %arg9[%c0_58, %c0_59], %144 {strides = array<i32>} : memref<8x128xf32, #tpu.memory_space<vmem>>, vector<8x128xf32>,
    return
  }
}

</mosaic_0001>

<llo_original>
// kernel: tpu_custom_call.1
$region0: #{tpu_custom_call.1}
  #allocation0 [shape = 'u32[]', space=smem, size = 0x4, offset = 0x4, fixed_abs, tag = 'smem constant byte address 0x4 - core index']
  #allocation1 [shape = 'u32[144,128]{1,0:T(1,128)}', space=vmem, size = 0x12000, scoped, tag = 'internal scratch']
  %s0 = inlined_call_operand.vmem [shape: bf16[64,16], index: 0, kind: input, shape index: {}]
  %s1 = inlined_call_operand.hbm [shape: bf16[16,32], index: 1, kind: input, shape index: {}]
  %s2 = inlined_call_operand.vmem [shape: bf16[32,32], index: 2, kind: input, shape index: {}]
  %s3 = inlined_call_operand.vmem [shape: f32[1,32], index: 3, kind: input, shape index: {}]
  %s4 = inlined_call_operand.vmem [shape: bf16[32,32], index: 4, kind: input, shape index: {}]
  %s5 = inlined_call_operand.vmem [shape: bf16[32,32], index: 5, kind: input, shape index: {}]
  %s6 = inlined_call_operand.vmem [shape: f32[1,32], index: 6, kind: input, shape index: {}]
  %s7 = inlined_call_operand.hbm [shape: bf16[256,128], index: 7, kind: input, shape index: {}]
  %s8 = inlined_call_operand.vmem [shape: f32[1,128], index: 8, kind: input, shape index: {}]
  %s9 = inlined_call_operand.hbm [shape: f32[8,128], index: 9, kind: output, shape index: {}]
  %s10 = sld [smem:[#allocation0]]
  $region54: #{tpu_custom_call.1} parent=0
    _
  %s12 = ssub.s32 1, %s10
  %s13 = scalar_select 0, %s12, %s10
  $region1: #{tpu_custom_call.1} parent=0
    #allocation2 [shape = 'u8[4096]{0}', space=vmem, size = 0x1000, scoped, tag = 'input window, operand 1, single buffered']
    #allocation3 [shape = 's32[1]{0}', space=sflag, size = 0x4, scoped, tag = 'scoped memory for tpu_custom_call.1']
    #allocation4 [shape = 's32[1]{0}', space=sflag, size = 0x4, scoped, tag = 'scoped memory for tpu_custom_call.1']
    #allocation5 [shape = 'u8[65536]{0}', space=vmem, size = 0x10000, scoped, tag = 'input window, operand 7, single buffered']
    #allocation6 [shape = 's32[1]{0}', space=sflag, size = 0x4, scoped, tag = 'scoped memory for tpu_custom_call.1']
    #allocation7 [shape = 'u8[4096]{0}', space=vmem, size = 0x1000, scoped, tag = 'output window, operand 0, single buffered']
    %14 = vsyncpa [#allocation3], 0
    %15 = vsyncpa [#allocation6], 0
    %16 = vsyncpa [#allocation4], 0
    // Predicated region
    $region2: #{tpu_custom_call.1} parent=1 // pred_check
      _
    $region3: #{tpu_custom_call.1} parent=1 // pred_check_branch
      %18 = sbr.rel (0) target = $region5
    $region4: #{tpu_custom_call.1} parent=1 // pred_region
      _
    $region5: #{tpu_custom_call.1} parent=1 // pred_fallthru
      _
    // Predicated region
    $region6: #{tpu_custom_call.1} parent=1 // pred_check
      _
    $region7: #{tpu_custom_call.1} parent=1 // pred_check_branch
      %20 = sbr.rel (0) target = $region9
    $region8: #{tpu_custom_call.1} parent=1 // pred_region
      %s22 = ssub.s32 128, 128
      %23 = vsyncadd [#allocation3], %s22
      %s24 = sshll.u32 [#allocation2], 4
      %s25 = int_to_ptr.vmem [resolvable:$true] %s24
      %30 = dma.hbm_to_vmem [thread:$0]  %s1, 128, %s25, [#allocation3], 64, 64, 4
    $region9: #{tpu_custom_call.1} parent=1 // pred_fallthru
      _
    // Predicated region
    $region10: #{tpu_custom_call.1} parent=1 // pred_check
      _
    $region11: #{tpu_custom_call.1} parent=1 // pred_check_branch
      %32 = sbr.rel (0) target = $region13
    $region12: #{tpu_custom_call.1} parent=1 // pred_region
      _
    $region13: #{tpu_custom_call.1} parent=1 // pred_fallthru
      _
    // Predicated region
    $region14: #{tpu_custom_call.1} parent=1 // pred_check
      _
    $region15: #{tpu_custom_call.1} parent=1 // pred_check_branch
      %34 = sbr.rel (0) target = $region17
    $region16: #{tpu_custom_call.1} parent=1 // pred_region
      _
    $region17: #{tpu_custom_call.1} parent=1 // pred_fallthru
      _
    // Predicated region
    $region18: #{tpu_custom_call.1} parent=1 // pred_check
      _
    $region19: #{tpu_custom_call.1} parent=1 // pred_check_branch
      %36 = sbr.rel (0) target = $region21
    $region20: #{tpu_custom_call.1} parent=1 // pred_region
      _
    $region21: #{tpu_custom_call.1} parent=1 // pred_fallthru
      _
    // Predicated region
    $region22: #{tpu_custom_call.1} parent=1 // pred_check
      _
    $region23: #{tpu_custom_call.1} parent=1 // pred_check_branch
      %38 = sbr.rel (0) target = $region25
    $region24: #{tpu_custom_call.1} parent=1 // pred_region
      _
    $region25: #{tpu_custom_call.1} parent=1 // pred_fallthru
      _
    // Predicated region
    $region26: #{tpu_custom_call.1} parent=1 // pred_check
      _
    $region27: #{tpu_custom_call.1} parent=1 // pred_check_branch
      %40 = sbr.rel (0) target = $region29
    $region28: #{tpu_custom_call.1} parent=1 // pred_region
      _
    $region29: #{tpu_custom_call.1} parent=1 // pred_fallthru
      _
    // Predicated region
    $region30: #{tpu_custom_call.1} parent=1 // pred_check
      _
    $region31: #{tpu_custom_call.1} parent=1 // pred_check_branch
      %42 = sbr.rel (0) target = $region33
    $region32: #{tpu_custom_call.1} parent=1 // pred_region
      %s44 = ssub.s32 2048, 2048
      %45 = vsyncadd [#allocation6], %s44
      %s46 = sshll.u32 [#allocation5], 4
      %s47 = int_to_ptr.vmem [resolvable:$true] %s46
      %52 = dma.hbm_to_vmem [thread:$0]  %s7, 2048, %s47, [#allocation6], 64, 64, 4
    $region33: #{tpu_custom_call.1} parent=1 // pred_fallthru
      _
    // Predicated region
    $region34: #{tpu_custom_call.1} parent=1 // pred_check
      _
    $region35: #{tpu_custom_call.1} parent=1 // pred_check_branch
      %54 = sbr.rel (0) target = $region37
    $region36: #{tpu_custom_call.1} parent=1 // pred_region
      _
    $region37: #{tpu_custom_call.1} parent=1 // pred_fallthru
      _
    // Predicated region
    $region38: #{tpu_custom_call.1} parent=1 // pred_check
      _
    $region39: #{tpu_custom_call.1} parent=1 // pred_check_branch
      %56 = sbr.rel (0) target = $region41
    $region40: #{tpu_custom_call.1} parent=1 // pred_region
      %57 = dma.done [#allocation3], 128
    $region41: #{tpu_custom_call.1} parent=1 // pred_fallthru
      _
    // Predicated region
    $region42: #{tpu_custom_call.1} parent=1 // pred_check
      _
    $region43: #{tpu_custom_call.1} parent=1 // pred_check_branch
      %59 = sbr.rel (0) target = $region45
    $region44: #{tpu_custom_call.1} parent=1 // pred_region
      %60 = dma.done [#allocation6], 2048
    $region45: #{tpu_custom_call.1} parent=1 // pred_fallthru
      _
    %v62 = vld [vmem:[%s0] sm:$0xf]
    %v63 = vld [vmem:[%s0 + $0x4] sm:$0xf]
    %v64 = vld [vmem:[%s0 + $0x8] sm:$0xf]
    %v65 = vld [vmem:[%s0 + $0xc] sm:$0xf]
    %v66 = vld [vmem:[%s0 + $0x10] sm:$0xf]
    %v67 = vld [vmem:[%s0 + $0x14] sm:$0xf]
    %v68 = vld [vmem:[%s0 + $0x18] sm:$0xf]
    %v69 = vld [vmem:[%s0 + $0x1c] sm:$0xf]
    %v70 = vld [vmem:[#allocation2] sm:$0xf]
    %v71 = vld [vmem:[#allocation2 + $0x4] sm:$0xf]
    %v72 = vld [vmem:[%s3] sm:$0x1]
    %v74 = vlaneseq
    %v75 = vshrl.u32 %v74, 7
    %v76 = vsub.s32 0, %v75
    %v77 = vrot.slane %v72, %v76
    %v87 = vunpack.c.l.b16 %v62
    %v88 = vunpack.c.l.b16 %v63
    %v89 = vunpack.c.l.b16 %v64
    %v90 = vunpack.c.l.b16 %v65
    %v91 = vunpack.c.l.b16 %v66
    %v92 = vunpack.c.l.b16 %v67
    %v93 = vunpack.c.l.b16 %v68
    %v94 = vunpack.c.l.b16 %v69
    %v95 = vpack.c.b16 %v88, %v87
    %v96 = vpack.c.b16 %v90, %v89
    %v97 = vpack.c.b16 %v92, %v91
    %v98 = vpack.c.b16 %v94, %v93
    %v101 = vunpack.c.l.b16 %v70
    %v102 = vunpack.c.l.b16 %v71
    %v103 = vpack.c.b16 %v102, %v101
    %vm105 = vcmask 130048
    %v107 = vsel %vm105, %v95, 0
    %v110 = vsel %vm105, %v96, 0
    %v113 = vsel %vm105, %v97, 0
    %v116 = vsel %vm105, %v98, 0
    %118 = vmatprep.subr.bf16.mxu0 0
    %119 = vmatpush1.bf16.msra.mxu0 0
    %120 = vmatprep.subr.bf16.mxu0 0
    %121 = vmatpush1.bf16.msra.mxu0 0
    %122 = vmatprep.subr.bf16.mxu0 0
    %123 = vmatpush1.bf16.msra.mxu0 0
    %124 = vmatprep.subr.bf16.mxu0 0
    %125 = vmatpush1.bf16.msra.mxu0 0
    %126 = vmatprep.subr.bf16.mxu0 0
    %127 = vmatpush1.bf16.msra.mxu0 0
    %128 = vmatprep.subr.bf16.mxu0 0
    %129 = vmatpush1.bf16.msra.mxu0 0
    %130 = vmatprep.subr.bf16.mxu0 0
    %131 = vmatpush1.bf16.msra.mxu0 0
    %132 = vmatprep.subr.bf16.mxu0 0
    %133 = vmatpush1.bf16.msra.mxu0 %v103
    %134 = vmatprep.subr.bf16.mxu0 0
    %135 = vmatpush2.bf16.msra.mxu0 0
    %136 = vmatprep.subr.bf16.mxu0 0
    %137 = vmatpush2.bf16.msra.mxu0 0
    %138 = vmatprep.subr.bf16.mxu0 0
    %139 = vmatpush2.bf16.msra.mxu0 0
    %140 = vmatprep.subr.bf16.mxu0 0
    %141 = vmatpush2.bf16.msra.mxu0 0
    %142 = vmatprep.subr.bf16.mxu0 0
    %143 = vmatpush2.bf16.msra.mxu0 0
    %144 = vmatprep.subr.bf16.mxu0 0
    %145 = vmatpush2.bf16.msra.mxu0 0
    %146 = vmatprep.subr.bf16.mxu0 0
    %147 = vmatpush2.bf16.msra.mxu0 0
    %148 = vmatprep.subr.bf16.mxu0 0
    %149 = vmatpush2.bf16.msra.mxu0 0
    %150 = vmatprep.mubr.bf16.mxu0 0
    %151 = vmatmul.mubr.bf16.gmra.mxu0 %v107
    %v152 = vpop.f32.mrf.mxu0
    %v153 = vadd.f32 %v77, %v152
    %v154 = vpop.f32.mrf.mxu0
    %v155 = vpop.f32.mrf.mxu0
    %v156 = vadd.f32 %v77, %v155
    %v157 = vpop.f32.mrf.mxu0
    %158 = vmatprep.mubr.bf16.mxu0 0
    %159 = vmatmul.mubr.bf16.gmra.mxu0 %v110
    %v160 = vpop.f32.mrf.mxu0
    %v161 = vadd.f32 %v77, %v160
    %v162 = vpop.f32.mrf.mxu0
    %v163 = vpop.f32.mrf.mxu0
    %v164 = vadd.f32 %v77, %v163
    %v165 = vpop.f32.mrf.mxu0
    %166 = vmatprep.mubr.bf16.mxu0 0
    %167 = vmatmul.mubr.bf16.gmra.mxu0 %v113
    %v168 = vpop.f32.mrf.mxu0
    %v169 = vadd.f32 %v77, %v168
    %v170 = vpop.f32.mrf.mxu0
    %v171 = vpop.f32.mrf.mxu0
    %v172 = vadd.f32 %v77, %v171
    %v173 = vpop.f32.mrf.mxu0
    %174 = vmatprep.mubr.bf16.mxu0 0
    %175 = vmatmul.mubr.bf16.gmra.mxu0 %v116
    %v176 = vpop.f32.mrf.mxu0
    %v177 = vadd.f32 %v77, %v176
    %v178 = vpop.f32.mrf.mxu0
    %v179 = vpop.f32.mrf.mxu0
    %v180 = vadd.f32 %v77, %v179
    %v181 = vpop.f32.mrf.mxu0
    %182 = vdwg.mxu0
    %v183 = vld [vmem:[%s2] sm:$0xf]
    %v184 = vld [vmem:[%s2 + $0x4] sm:$0xf]
    %v185 = vld [vmem:[%s2 + $0x8] sm:$0xf]
    %v186 = vld [vmem:[%s2 + $0xc] sm:$0xf]
    %v187 = vld [vmem:[%s4] sm:$0xf]
    %v188 = vld [vmem:[%s4 + $0x4] sm:$0xf]
    %v189 = vld [vmem:[%s4 + $0x8] sm:$0xf]
    %v190 = vld [vmem:[%s4 + $0xc] sm:$0xf]
    %v191 = vld [vmem:[%s5] sm:$0xf]
    %v192 = vld [vmem:[%s5 + $0x4] sm:$0xf]
    %v193 = vld [vmem:[%s5 + $0x8] sm:$0xf]
    %v194 = vld [vmem:[%s5 + $0xc] sm:$0xf]
    %v195 = vld [vmem:[%s6] sm:$0x1]
    %v197 = vlaneseq
    %v198 = vshrl.u32 %v197, 7
    %v199 = vsub.s32 0, %v198
    %v200 = vrot.slane %v195, %v199
    %v202 = vld [vmem:[%s8] sm:$0x1]
    %v204 = vlaneseq
    %v205 = vshrl.u32 %v204, 7
    %v206 = vsub.s32 0, %v205
    %v207 = vrot.slane %v202, %v206
    %v213 = vunpack.c.l.b16 %v183
    %v214 = vunpack.c.l.b16 %v184
    %v215 = vunpack.c.l.b16 %v185
    %v216 = vunpack.c.l.b16 %v186
    %v217 = vpack.c.b16 %v214, %v213
    %v218 = vpack.c.b16 %v216, %v215
    %vm221 = vcmask 261120
    %v223 = vsel %vm221, 0, 0
    %225 = vmatprep.subr.bf16.mxu0 0
    %226 = vmatpush1.bf16.msra.mxu0 0
    %227 = vmatprep.subr.bf16.mxu0 0
    %228 = vmatpush1.bf16.msra.mxu0 0
    %229 = vmatprep.subr.bf16.mxu0 0
    %230 = vmatpush1.bf16.msra.mxu0 0
    %231 = vmatprep.subr.bf16.mxu0 0
    %232 = vmatpush1.bf16.msra.mxu0 0
    %233 = vmatprep.subr.bf16.mxu0 0
    %234 = vmatpush1.bf16.msra.mxu0 0
    %235 = vmatprep.subr.bf16.mxu0 0
    %236 = vmatpush1.bf16.msra.mxu0 0
    %237 = vmatprep.subr.bf16.mxu0 0
    %238 = vmatpush1.bf16.msra.mxu0 %v218
    %239 = vmatprep.subr.bf16.mxu0 0
    %240 = vmatpush1.bf16.msra.mxu0 %v217
    %241 = vmatprep.subr.bf16.mxu0 0
    %242 = vmatpush2.bf16.msra.mxu0 0
    %243 = vmatprep.subr.bf16.mxu0 0
    %244 = vmatpush2.bf16.msra.mxu0 0
    %245 = vmatprep.subr.bf16.mxu0 0
    %246 = vmatpush2.bf16.msra.mxu0 0
    %247 = vmatprep.subr.bf16.mxu0 0
    %248 = vmatpush2.bf16.msra.mxu0 0
    %249 = vmatprep.subr.bf16.mxu0 0
    %250 = vmatpush2.bf16.msra.mxu0 0
    %251 = vmatprep.subr.bf16.mxu0 0
    %252 = vmatpush2.bf16.msra.mxu0 0
    %253 = vmatprep.subr.bf16.mxu0 0
    %254 = vmatpush2.bf16.msra.mxu0 0
    %255 = vmatprep.subr.bf16.mxu0 0
    %256 = vmatpush2.bf16.msra.mxu0 0
    %257 = vmatprep.mubr.bf16.mxu0 0
    %258 = vmatmul.mubr.bf16.gmra.mxu0 %v223
    %v259 = vpop.f32.mrf.mxu0
    %v260 = vadd.f32 0.0, %v259
    %v261 = vpop.f32.mrf.mxu0
    %v262 = vpop.f32.mrf.mxu0
    %v263 = vpop.f32.mrf.mxu0
    %264 = vdwg.mxu0
    %v265 = vadd.f32 %v153, %v260
    %v266 = vtanh.pop %v265
    %v267 = vpack.c.bf16 %v266, %v266
    %v272 = vunpack.c.l.b16 %v187
    %v273 = vunpack.c.l.b16 %v188
    %v274 = vunpack.c.l.b16 %v189
    %v275 = vunpack.c.l.b16 %v190
    %v276 = vpack.c.b16 %v273, %v272
    %v277 = vpack.c.b16 %v275, %v274
    %v281 = vsel %vm221, %v267, 0
    %283 = vmatprep.subr.bf16.mxu0 0
    %284 = vmatpush1.bf16.msra.mxu0 0
    %285 = vmatprep.subr.bf16.mxu0 0
    %286 = vmatpush1.bf16.msra.mxu0 0
    %287 = vmatprep.subr.bf16.mxu0 0
    %288 = vmatpush1.bf16.msra.mxu0 0
    %289 = vmatprep.subr.bf16.mxu0 0
    %290 = vmatpush1.bf16.msra.mxu0 0
    %291 = vmatprep.subr.bf16.mxu0 0
    %292 = vmatpush1.bf16.msra.mxu0 0
    %293 = vmatprep.subr.bf16.mxu0 0
    %294 = vmatpush1.bf16.msra.mxu0 0
    %295 = vmatprep.subr.bf16.mxu0 0
    %296 = vmatpush1.bf16.msra.mxu0 %v277
    %297 = vmatprep.subr.bf16.mxu0 0
    %298 = vmatpush1.bf16.msra.mxu0 %v276
    %299 = vmatprep.subr.bf16.mxu0 0
    %300 = vmatpush2.bf16.msra.mxu0 0
    %301 = vmatprep.subr.bf16.mxu0 0
    %302 = vmatpush2.bf16.msra.mxu0 0
    %303 = vmatprep.subr.bf16.mxu0 0
    %304 = vmatpush2.bf16.msra.mxu0 0
    %305 = vmatprep.subr.bf16.mxu0 0
    %306 = vmatpush2.bf16.msra.mxu0 0
    %307 = vmatprep.subr.bf16.mxu0 0
    %308 = vmatpush2.bf16.msra.mxu0 0
    %309 = vmatprep.subr.bf16.mxu0 0
    %310 = vmatpush2.bf16.msra.mxu0 0
    %311 = vmatprep.subr.bf16.mxu0 0
    %312 = vmatpush2.bf16.msra.mxu0 0
    %313 = vmatprep.subr.bf16.mxu0 0
    %314 = vmatpush2.bf16.msra.mxu0 0
    %315 = vmatprep.mubr.bf16.mxu0 0
    %316 = vmatmul.mubr.bf16.gmra.mxu0 %v281
    %v317 = vpop.f32.mrf.mxu0
    %v318 = vadd.f32 0.0, %v317
    %v319 = vpop.f32.mrf.mxu0
    %v320 = vpop.f32.mrf.mxu0
    %v321 = vpop.f32.mrf.mxu0
    %322 = vdwg.mxu0
    %v323 = vadd.f32 %v200, %v318
    %v328 = vunpack.c.l.b16 %v191
    %v329 = vunpack.c.l.b16 %v192
    %v330 = vunpack.c.l.b16 %v193
    %v331 = vunpack.c.l.b16 %v194
    %v332 = vpack.c.b16 %v329, %v328
    %v333 = vpack.c.b16 %v331, %v330
    %336 = vmatprep.subr.bf16.mxu0 0
    %337 = vmatpush1.bf16.msra.mxu0 0
    %338 = vmatprep.subr.bf16.mxu0 0
    %339 = vmatpush1.bf16.msra.mxu0 0
    %340 = vmatprep.subr.bf16.mxu0 0
    %341 = vmatpush1.bf16.msra.mxu0 0
    %342 = vmatprep.subr.bf16.mxu0 0
    %343 = vmatpush1.bf16.msra.mxu0 0
    %344 = vmatprep.subr.bf16.mxu0 0
    %345 = vmatpush1.bf16.msra.mxu0 0
    %346 = vmatprep.subr.bf16.mxu0 0
    %347 = vmatpush1.bf16.msra.mxu0 0
    %348 = vmatprep.subr.bf16.mxu0 0
    %349 = vmatpush1.bf16.msra.mxu0 %v333
    %350 = vmatprep.subr.bf16.mxu0 0
    %351 = vmatpush1.bf16.msra.mxu0 %v332
    %352 = vmatprep.subr.bf16.mxu0 0
    %353 = vmatpush2.bf16.msra.mxu0 0
    %354 = vmatprep.subr.bf16.mxu0 0
    %355 = vmatpush2.bf16.msra.mxu0 0
    %356 = vmatprep.subr.bf16.mxu0 0
    %357 = vmatpush2.bf16.msra.mxu0 0
    %358 = vmatprep.subr.bf16.mxu0 0
    %359 = vmatpush2.bf16.msra.mxu0 0
    %360 = vmatprep.subr.bf16.mxu0 0
    %361 = vmatpush2.bf16.msra.mxu0 0
    %362 = vmatprep.subr.bf16.mxu0 0
    %363 = vmatpush2.bf16.msra.mxu0 0
    %364 = vmatprep.subr.bf16.mxu0 0
    %365 = vmatpush2.bf16.msra.mxu0 0
    %366 = vmatprep.subr.bf16.mxu0 0
    %367 = vmatpush2.bf16.msra.mxu0 0
    %368 = vmatprep.mubr.bf16.mxu0 0
    %369 = vmatmul.mubr.bf16.gmra.mxu0 %v223
    %v370 = vpop.f32.mrf.mxu0
    %v371 = vadd.f32 0.0, %v370
    %v372 = vpop.f32.mrf.mxu0
    %v373 = vpop.f32.mrf.mxu0
    %v374 = vpop.f32.mrf.mxu0
    %375 = vdwg.mxu0
    %v376 = vadd.f32 %v323, %v371
    %v377 = vtanh.pop %v376
    %v378 = vpack.c.bf16 %v377, %v377
    %v379 = vld [vmem:[#allocation5] sm:$0xf]
    %v380 = vld [vmem:[#allocation5 + $0x4] sm:$0xf]
    %v381 = vld [vmem:[#allocation5 + $0x8] sm:$0xf]
    %v382 = vld [vmem:[#allocation5 + $0xc] sm:$0xf]
    %v387 = vunpack.c.l.b16 %v379
    %v388 = vunpack.c.l.b16 %v380
    %v389 = vunpack.c.l.b16 %v381
    %v390 = vunpack.c.l.b16 %v382
    %v391 = vpack.c.b16 %v388, %v387
    %v392 = vpack.c.b16 %v390, %v389
    %v396 = vsel %vm221, %v378, 0
    %398 = vmatprep.subr.bf16.mxu0 0
    %399 = vmatpush1.bf16.msra.mxu0 0
    %400 = vmatprep.subr.bf16.mxu0 0
    %401 = vmatpush1.bf16.msra.mxu0 0
    %402 = vmatprep.subr.bf16.mxu0 0
    %403 = vmatpush1.bf16.msra.mxu0 0
    %404 = vmatprep.subr.bf16.mxu0 0
    %405 = vmatpush1.bf16.msra.mxu0 0
    %406 = vmatprep.subr.bf16.mxu0 0
    %407 = vmatpush1.bf16.msra.mxu0 0
    %408 = vmatprep.subr.bf16.mxu0 0
    %409 = vmatpush1.bf16.msra.mxu0 0
    %410 = vmatprep.subr.bf16.mxu0 0
    %411 = vmatpush1.bf16.msra.mxu0 %v392
    %412 = vmatprep.subr.bf16.mxu0 0
    %413 = vmatpush1.bf16.msra.mxu0 %v391
    %414 = vmatprep.subr.bf16.mxu0 0
    %415 = vmatpush2.bf16.msra.mxu0 0
    %416 = vmatprep.subr.bf16.mxu0 0
    %417 = vmatpush2.bf16.msra.mxu0 0
    %418 = vmatprep.subr.bf16.mxu0 0
    %419 = vmatpush2.bf16.msra.mxu0 0
    %420 = vmatprep.subr.bf16.mxu0 0
    %421 = vmatpush2.bf16.msra.mxu0 0
    %422 = vmatprep.subr.bf16.mxu0 0
    %423 = vmatpush2.bf16.msra.mxu0 0
    %424 = vmatprep.subr.bf16.mxu0 0
    %425 = vmatpush2.bf16.msra.mxu0 0
    %426 = vmatprep.subr.bf16.mxu0 0
    %427 = vmatpush2.bf16.msra.mxu0 0
    %428 = vmatprep.subr.bf16.mxu0 0
    %429 = vmatpush2.bf16.msra.mxu0 0
    %430 = vmatprep.mubr.bf16.mxu0 0
    %431 = vmatmul.mubr.bf16.gmra.mxu0 %v396
    %v432 = vpop.f32.mrf.mxu0
    %v433 = vadd.f32 0.0, %v432
    %v434 = vpop.f32.mrf.mxu0
    %v435 = vpop.f32.mrf.mxu0
    %v436 = vpop.f32.mrf.mxu0
    %437 = vdwg.mxu0
    %v438 = vadd.f32 %v207, %v433
    %439 = vmatprep.subr.bf16.mxu0 0
    %440 = vmatpush1.bf16.msra.mxu0 0
    %441 = vmatprep.subr.bf16.mxu0 0
    %442 = vmatpush1.bf16.msra.mxu0 0
    %443 = vmatprep.subr.bf16.mxu0 0
    %444 = vmatpush1.bf16.msra.mxu0 0
    %445 = vmatprep.subr.bf16.mxu0 0
    %446 = vmatpush1.bf16.msra.mxu0 0
    %447 = vmatprep.subr.bf16.mxu0 0
    %448 = vmatpush1.bf16.msra.mxu0 0
    %449 = vmatprep.subr.bf16.mxu0 0
    %450 = vmatpush1.bf16.msra.mxu0 0
    %451 = vmatprep.subr.bf16.mxu0 0
    %452 = vmatpush1.bf16.msra.mxu0 %v218
    %453 = vmatprep.subr.bf16.mxu0 0
    %454 = vmatpush1.bf16.msra.mxu0 %v217
    %455 = vmatprep.subr.bf16.mxu0 0
    %456 = vmatpush2.bf16.msra.mxu0 0
    %457 = vmatprep.subr.bf16.mxu0 0
    %458 = vmatpush2.bf16.msra.mxu0 0
    %459 = vmatprep.subr.bf16.mxu0 0
    %460 = vmatpush2.bf16.msra.mxu0 0
    %461 = vmatprep.subr.bf16.mxu0 0
    %462 = vmatpush2.bf16.msra.mxu0 0
    %463 = vmatprep.subr.bf16.mxu0 0
    %464 = vmatpush2.bf16.msra.mxu0 0
    %465 = vmatprep.subr.bf16.mxu0 0
    %466 = vmatpush2.bf16.msra.mxu0 0
    %467 = vmatprep.subr.bf16.mxu0 0
    %468 = vmatpush2.bf16.msra.mxu0 0
    %469 = vmatprep.subr.bf16.mxu0 0
    %470 = vmatpush2.bf16.msra.mxu0 0
    %471 = vmatprep.mubr.bf16.mxu0 0
    %472 = vmatmul.mubr.bf16.gmra.mxu0 %v281
    %v473 = vpop.f32.mrf.mxu0
    %v474 = vadd.f32 0.0, %v473
    %v475 = vpop.f32.mrf.mxu0
    %v476 = vpop.f32.mrf.mxu0
    %v477 = vpop.f32.mrf.mxu0
    %478 = vdwg.mxu0
    %v479 = vadd.f32 %v156, %v474
    %v480 = vtanh.pop %v479
    %v481 = vpack.c.bf16 %v480, %v480
    %v483 = vsel %vm221, %v481, 0
    %485 = vmatprep.subr.bf16.mxu0 0
    %486 = vmatpush1.bf16.msra.mxu0 0
    %487 = vmatprep.subr.bf16.mxu0 0
    %488 = vmatpush1.bf16.msra.mxu0 0
    %489 = vmatprep.subr.bf16.mxu0 0
    %490 = vmatpush1.bf16.msra.mxu0 0
    %491 = vmatprep.subr.bf16.mxu0 0
    %492 = vmatpush1.bf16.msra.mxu0 0
    %493 = vmatprep.subr.bf16.mxu0 0
    %494 = vmatpush1.bf16.msra.mxu0 0
    %495 = vmatprep.subr.bf16.mxu0 0
    %496 = vmatpush1.bf16.msra.mxu0 0
    %497 = vmatprep.subr.bf16.mxu0 0
    %498 = vmatpush1.bf16.msra.mxu0 %v277
    %499 = vmatprep.subr.bf16.mxu0 0
    %500 = vmatpush1.bf16.msra.mxu0 %v276
    %501 = vmatprep.subr.bf16.mxu0 0
    %502 = vmatpush2.bf16.msra.mxu0 0
    %503 = vmatprep.subr.bf16.mxu0 0
    %504 = vmatpush2.bf16.msra.mxu0 0
    %505 = vmatprep.subr.bf16.mxu0 0
    %506 = vmatpush2.bf16.msra.mxu0 0
    %507 = vmatprep.subr.bf16.mxu0 0
    %508 = vmatpush2.bf16.msra.mxu0 0
    %509 = vmatprep.subr.bf16.mxu0 0
    %510 = vmatpush2.bf16.msra.mxu0 0
    %511 = vmatprep.subr.bf16.mxu0 0
    %512 = vmatpush2.bf16.msra.mxu0 0
    %513 = vmatprep.subr.bf16.mxu0 0
    %514 = vmatpush2.bf16.msra.mxu0 0
    %515 = vmatprep.subr.bf16.mxu0 0
    %516 = vmatpush2.bf16.msra.mxu0 0
    %517 = vmatprep.mubr.bf16.mxu0 0
    %518 = vmatmul.mubr.bf16.gmra.mxu0 %v483
    %v519 = vpop.f32.mrf.mxu0
    %v520 = vadd.f32 0.0, %v519
    %v521 = vpop.f32.mrf.mxu0
    %v522 = vpop.f32.mrf.mxu0
    %v523 = vpop.f32.mrf.mxu0
    %524 = vdwg.mxu0
    %v525 = vadd.f32 %v200, %v520
    %526 = vmatprep.subr.bf16.mxu0 0
    %527 = vmatpush1.bf16.msra.mxu0 0
    %528 = vmatprep.subr.bf16.mxu0 0
    %529 = vmatpush1.bf16.msra.mxu0 0
    %530 = vmatprep.subr.bf16.mxu0 0
    %531 = vmatpush1.bf16.msra.mxu0 0
    %532 = vmatprep.subr.bf16.mxu0 0
    %533 = vmatpush1.bf16.msra.mxu0 0
    %534 = vmatprep.subr.bf16.mxu0 0
    %535 = vmatpush1.bf16.msra.mxu0 0
    %536 = vmatprep.subr.bf16.mxu0 0
    %537 = vmatpush1.bf16.msra.mxu0 0
    %538 = vmatprep.subr.bf16.mxu0 0
    %539 = vmatpush1.bf16.msra.mxu0 %v333
    %540 = vmatprep.subr.bf16.mxu0 0
    %541 = vmatpush1.bf16.msra.mxu0 %v332
    %542 = vmatprep.subr.bf16.mxu0 0
    %543 = vmatpush2.bf16.msra.mxu0 0
    %544 = vmatprep.subr.bf16.mxu0 0
    %545 = vmatpush2.bf16.msra.mxu0 0
    %546 = vmatprep.subr.bf16.mxu0 0
    %547 = vmatpush2.bf16.msra.mxu0 0
    %548 = vmatprep.subr.bf16.mxu0 0
    %549 = vmatpush2.bf16.msra.mxu0 0
    %550 = vmatprep.subr.bf16.mxu0 0
    %551 = vmatpush2.bf16.msra.mxu0 0
    %552 = vmatprep.subr.bf16.mxu0 0
    %553 = vmatpush2.bf16.msra.mxu0 0
    %554 = vmatprep.subr.bf16.mxu0 0
    %555 = vmatpush2.bf16.msra.mxu0 0
    %556 = vmatprep.subr.bf16.mxu0 0
    %557 = vmatpush2.bf16.msra.mxu0 0
    %558 = vmatprep.mubr.bf16.mxu0 0
    %559 = vmatmul.mubr.bf16.gmra.mxu0 %v396
    %v560 = vpop.f32.mrf.mxu0
    %v561 = vadd.f32 0.0, %v560
    %v562 = vpop.f32.mrf.mxu0
    %v563 = vpop.f32.mrf.mxu0
    %v564 = vpop.f32.mrf.mxu0
    %565 = vdwg.mxu0
    %v566 = vadd.f32 %v525, %v561
    %v567 = vtanh.pop %v566
    %v568 = vpack.c.bf16 %v567, %v567
    %v569 = vld [vmem:[#allocation5 + $0x10] sm:$0xf]
    %v570 = vld [vmem:[#allocation5 + $0x14] sm:$0xf]
    %v571 = vld [vmem:[#allocation5 + $0x18] sm:$0xf]
    %v572 = vld [vmem:[#allocation5 + $0x1c] sm:$0xf]
    %v577 = vunpack.c.l.b16 %v569
    %v578 = vunpack.c.l.b16 %v570
    %v579 = vunpack.c.l.b16 %v571
    %v580 = vunpack.c.l.b16 %v572
    %v581 = vpack.c.b16 %v578, %v577
    %v582 = vpack.c.b16 %v580, %v579
    %v586 = vsel %vm221, %v568, 0
    %588 = vmatprep.subr.bf16.mxu0 0
    %589 = vmatpush1.bf16.msra.mxu0 0
    %590 = vmatprep.subr.bf16.mxu0 0
    %591 = vmatpush1.bf16.msra.mxu0 0
    %592 = vmatprep.subr.bf16.mxu0 0
    %593 = vmatpush1.bf16.msra.mxu0 0
    %594 = vmatprep.subr.bf16.mxu0 0
    %595 = vmatpush1.bf16.msra.mxu0 0
    %596 = vmatprep.subr.bf16.mxu0 0
    %597 = vmatpush1.bf16.msra.mxu0 0
    %598 = vmatprep.subr.bf16.mxu0 0
    %599 = vmatpush1.bf16.msra.mxu0 0
    %600 = vmatprep.subr.bf16.mxu0 0
    %601 = vmatpush1.bf16.msra.mxu0 %v582
    %602 = vmatprep.subr.bf16.mxu0 0
    %603 = vmatpush1.bf16.msra.mxu0 %v581
    %604 = vmatprep.subr.bf16.mxu0 0
    %605 = vmatpush2.bf16.msra.mxu0 0
    %606 = vmatprep.subr.bf16.mxu0 0
    %607 = vmatpush2.bf16.msra.mxu0 0
    %608 = vmatprep.subr.bf16.mxu0 0
    %609 = vmatpush2.bf16.msra.mxu0 0
    %610 = vmatprep.subr.bf16.mxu0 0
    %611 = vmatpush2.bf16.msra.mxu0 0
    %612 = vmatprep.subr.bf16.mxu0 0
    %613 = vmatpush2.bf16.msra.mxu0 0
    %614 = vmatprep.subr.bf16.mxu0 0
    %615 = vmatpush2.bf16.msra.mxu0 0
    %616 = vmatprep.subr.bf16.mxu0 0
    %617 = vmatpush2.bf16.msra.mxu0 0
    %618 = vmatprep.subr.bf16.mxu0 0
    %619 = vmatpush2.bf16.msra.mxu0 0
    %620 = vmatprep.mubr.bf16.mxu0 0
    %621 = vmatmul.mubr.bf16.gmra.mxu0 %v586
    %v622 = vpop.f32.mrf.mxu0
    %v623 = vadd.f32 0.0, %v622
    %v624 = vpop.f32.mrf.mxu0
    %v625 = vpop.f32.mrf.mxu0
    %v626 = vpop.f32.mrf.mxu0
    %627 = vdwg.mxu0
    %v628 = vadd.f32 %v438, %v623
    %629 = vmatprep.subr.bf16.mxu0 0
    %630 = vmatpush1.bf16.msra.mxu0 0
    %631 = vmatprep.subr.bf16.mxu0 0
    %632 = vmatpush1.bf16.msra.mxu0 0
    %633 = vmatprep.subr.bf16.mxu0 0
    %634 = vmatpush1.bf16.msra.mxu0 0
    %635 = vmatprep.subr.bf16.mxu0 0
    %636 = vmatpush1.bf16.msra.mxu0 0
    %637 = vmatprep.subr.bf16.mxu0 0
    %638 = vmatpush1.bf16.msra.mxu0 0
    %639 = vmatprep.subr.bf16.mxu0 0
    %640 = vmatpush1.bf16.msra.mxu0 0
    %641 = vmatprep.subr.bf16.mxu0 0
    %642 = vmatpush1.bf16.msra.mxu0 %v218
    %643 = vmatprep.subr.bf16.mxu0 0
    %644 = vmatpush1.bf16.msra.mxu0 %v217
    %645 = vmatprep.subr.bf16.mxu0 0
    %646 = vmatpush2.bf16.msra.mxu0 0
    %647 = vmatprep.subr.bf16.mxu0 0
    %648 = vmatpush2.bf16.msra.mxu0 0
    %649 = vmatprep.subr.bf16.mxu0 0
    %650 = vmatpush2.bf16.msra.mxu0 0
    %651 = vmatprep.subr.bf16.mxu0 0
    %652 = vmatpush2.bf16.msra.mxu0 0
    %653 = vmatprep.subr.bf16.mxu0 0
    %654 = vmatpush2.bf16.msra.mxu0 0
    %655 = vmatprep.subr.bf16.mxu0 0
    %656 = vmatpush2.bf16.msra.mxu0 0
    %657 = vmatprep.subr.bf16.mxu0 0
    %658 = vmatpush2.bf16.msra.mxu0 0
    %659 = vmatprep.subr.bf16.mxu0 0
    %660 = vmatpush2.bf16.msra.mxu0 0
    %661 = vmatprep.mubr.bf16.mxu0 0
    %662 = vmatmul.mubr.bf16.gmra.mxu0 %v483
    %v663 = vpop.f32.mrf.mxu0
    %v664 = vadd.f32 0.0, %v663
    %v665 = vpop.f32.mrf.mxu0
    %v666 = vpop.f32.mrf.mxu0
    %v667 = vpop.f32.mrf.mxu0
    %668 = vdwg.mxu0
    %v669 = vadd.f32 %v161, %v664
    %v670 = vtanh.pop %v669
    %v671 = vpack.c.bf16 %v670, %v670
    %v673 = vsel %vm221, %v671, 0
    %675 = vmatprep.subr.bf16.mxu0 0
    %676 = vmatpush1.bf16.msra.mxu0 0
    %677 = vmatprep.subr.bf16.mxu0 0
    %678 = vmatpush1.bf16.msra.mxu0 0
    %679 = vmatprep.subr.bf16.mxu0 0
    %680 = vmatpush1.bf16.msra.mxu0 0
    %681 = vmatprep.subr.bf16.mxu0 0
    %682 = vmatpush1.bf16.msra.mxu0 0
    %683 = vmatprep.subr.bf16.mxu0 0
    %684 = vmatpush1.bf16.msra.mxu0 0
    %685 = vmatprep.subr.bf16.mxu0 0
    %686 = vmatpush1.bf16.msra.mxu0 0
    %687 = vmatprep.subr.bf16.mxu0 0
    %688 = vmatpush1.bf16.msra.mxu0 %v277
    %689 = vmatprep.subr.bf16.mxu0 0
    %690 = vmatpush1.bf16.msra.mxu0 %v276
    %691 = vmatprep.subr.bf16.mxu0 0
    %692 = vmatpush2.bf16.msra.mxu0 0
    %693 = vmatprep.subr.bf16.mxu0 0
    %694 = vmatpush2.bf16.msra.mxu0 0
    %695 = vmatprep.subr.bf16.mxu0 0
    %696 = vmatpush2.bf16.msra.mxu0 0
    %697 = vmatprep.subr.bf16.mxu0 0
    %698 = vmatpush2.bf16.msra.mxu0 0
    %699 = vmatprep.subr.bf16.mxu0 0
    %700 = vmatpush2.bf16.msra.mxu0 0
    %701 = vmatprep.subr.bf16.mxu0 0
    %702 = vmatpush2.bf16.msra.mxu0 0
    %703 = vmatprep.subr.bf16.mxu0 0
    %704 = vmatpush2.bf16.msra.mxu0 0
    %705 = vmatprep.subr.bf16.mxu0 0
    %706 = vmatpush2.bf16.msra.mxu0 0
    %707 = vmatprep.mubr.bf16.mxu0 0
    %708 = vmatmul.mubr.bf16.gmra.mxu0 %v673
    %v709 = vpop.f32.mrf.mxu0
    %v710 = vadd.f32 0.0, %v709
    %v711 = vpop.f32.mrf.mxu0
    %v712 = vpop.f32.mrf.mxu0
    %v713 = vpop.f32.mrf.mxu0
    %714 = vdwg.mxu0
    %v715 = vadd.f32 %v200, %v710
    %716 = vmatprep.subr.bf16.mxu0 0
    %717 = vmatpush1.bf16.msra.mxu0 0
    %718 = vmatprep.subr.bf16.mxu0 0
    %719 = vmatpush1.bf16.msra.mxu0 0
    %720 = vmatprep.subr.bf16.mxu0 0
    %721 = vmatpush1.bf16.msra.mxu0 0
    %722 = vmatprep.subr.bf16.mxu0 0
    %723 = vmatpush1.bf16.msra.mxu0 0
    %724 = vmatprep.subr.bf16.mxu0 0
    %725 = vmatpush1.bf16.msra.mxu0 0
    %726 = vmatprep.subr.bf16.mxu0 0
    %727 = vmatpush1.bf16.msra.mxu0 0
    %728 = vmatprep.subr.bf16.mxu0 0
    %729 = vmatpush1.bf16.msra.mxu0 %v333
    %730 = vmatprep.subr.bf16.mxu0 0
    %731 = vmatpush1.bf16.msra.mxu0 %v332
    %732 = vmatprep.subr.bf16.mxu0 0
    %733 = vmatpush2.bf16.msra.mxu0 0
    %734 = vmatprep.subr.bf16.mxu0 0
    %735 = vmatpush2.bf16.msra.mxu0 0
    %736 = vmatprep.subr.bf16.mxu0 0
    %737 = vmatpush2.bf16.msra.mxu0 0
    %738 = vmatprep.subr.bf16.mxu0 0
    %739 = vmatpush2.bf16.msra.mxu0 0
    %740 = vmatprep.subr.bf16.mxu0 0
    %741 = vmatpush2.bf16.msra.mxu0 0
    %742 = vmatprep.subr.bf16.mxu0 0
    %743 = vmatpush2.bf16.msra.mxu0 0
    %744 = vmatprep.subr.bf16.mxu0 0
    %745 = vmatpush2.bf16.msra.mxu0 0
    %746 = vmatprep.subr.bf16.mxu0 0
    %747 = vmatpush2.bf16.msra.mxu0 0
    %748 = vmatprep.mubr.bf16.mxu0 0
    %749 = vmatmul.mubr.bf16.gmra.mxu0 %v586
    %v750 = vpop.f32.mrf.mxu0
    %v751 = vadd.f32 0.0, %v750
    %v752 = vpop.f32.mrf.mxu0
    %v753 = vpop.f32.mrf.mxu0
    %v754 = vpop.f32.mrf.mxu0
    %755 = vdwg.mxu0
    %v756 = vadd.f32 %v715, %v751
    %v757 = vtanh.pop %v756
    %v758 = vpack.c.bf16 %v757, %v757
    %v759 = vld [vmem:[#allocation5 + $0x20] sm:$0xf]
    %v760 = vld [vmem:[#allocation5 + $0x24] sm:$0xf]
    %v761 = vld [vmem:[#allocation5 + $0x28] sm:$0xf]
    %v762 = vld [vmem:[#allocation5 + $0x2c] sm:$0xf]
    %v767 = vunpack.c.l.b16 %v759
    %v768 = vunpack.c.l.b16 %v760
    %v769 = vunpack.c.l.b16 %v761
    %v770 = vunpack.c.l.b16 %v762
    %v771 = vpack.c.b16 %v768, %v767
    %v772 = vpack.c.b16 %v770, %v769
    %v776 = vsel %vm221, %v758, 0
    %778 = vmatprep.subr.bf16.mxu0 0
    %779 = vmatpush1.bf16.msra.mxu0 0
    %780 = vmatprep.subr.bf16.mxu0 0
    %781 = vmatpush1.bf16.msra.mxu0 0
    %782 = vmatprep.subr.bf16.mxu0 0
    %783 = vmatpush1.bf16.msra.mxu0 0
    %784 = vmatprep.subr.bf16.mxu0 0
    %785 = vmatpush1.bf16.msra.mxu0 0
    %786 = vmatprep.subr.bf16.mxu0 0
    %787 = vmatpush1.bf16.msra.mxu0 0
    %788 = vmatprep.subr.bf16.mxu0 0
    %789 = vmatpush1.bf16.msra.mxu0 0
    %790 = vmatprep.subr.bf16.mxu0 0
    %791 = vmatpush1.bf16.msra.mxu0 %v772
    %792 = vmatprep.subr.bf16.mxu0 0
    %793 = vmatpush1.bf16.msra.mxu0 %v771
    %794 = vmatprep.subr.bf16.mxu0 0
    %795 = vmatpush2.bf16.msra.mxu0 0
    %796 = vmatprep.subr.bf16.mxu0 0
    %797 = vmatpush2.bf16.msra.mxu0 0
    %798 = vmatprep.subr.bf16.mxu0 0
    %799 = vmatpush2.bf16.msra.mxu0 0
    %800 = vmatprep.subr.bf16.mxu0 0
    %801 = vmatpush2.bf16.msra.mxu0 0
    %802 = vmatprep.subr.bf16.mxu0 0
    %803 = vmatpush2.bf16.msra.mxu0 0
    %804 = vmatprep.subr.bf16.mxu0 0
    %805 = vmatpush2.bf16.msra.mxu0 0
    %806 = vmatprep.subr.bf16.mxu0 0
    %807 = vmatpush2.bf16.msra.mxu0 0
    %808 = vmatprep.subr.bf16.mxu0 0
    %809 = vmatpush2.bf16.msra.mxu0 0
    %810 = vmatprep.mubr.bf16.mxu0 0
    %811 = vmatmul.mubr.bf16.gmra.mxu0 %v776
    %v812 = vpop.f32.mrf.mxu0
    %v813 = vadd.f32 0.0, %v812
    %v814 = vpop.f32.mrf.mxu0
    %v815 = vpop.f32.mrf.mxu0
    %v816 = vpop.f32.mrf.mxu0
    %817 = vdwg.mxu0
    %v818 = vadd.f32 %v628, %v813
    %819 = vmatprep.subr.bf16.mxu0 0
    %820 = vmatpush1.bf16.msra.mxu0 0
    %821 = vmatprep.subr.bf16.mxu0 0
    %822 = vmatpush1.bf16.msra.mxu0 0
    %823 = vmatprep.subr.bf16.mxu0 0
    %824 = vmatpush1.bf16.msra.mxu0 0
    %825 = vmatprep.subr.bf16.mxu0 0
    %826 = vmatpush1.bf16.msra.mxu0 0
    %827 = vmatprep.subr.bf16.mxu0 0
    %828 = vmatpush1.bf16.msra.mxu0 0
    %829 = vmatprep.subr.bf16.mxu0 0
    %830 = vmatpush1.bf16.msra.mxu0 0
    %831 = vmatprep.subr.bf16.mxu0 0
    %832 = vmatpush1.bf16.msra.mxu0 %v218
    %833 = vmatprep.subr.bf16.mxu0 0
    %834 = vmatpush1.bf16.msra.mxu0 %v217
    %835 = vmatprep.subr.bf16.mxu0 0
    %836 = vmatpush2.bf16.msra.mxu0 0
    %837 = vmatprep.subr.bf16.mxu0 0
    %838 = vmatpush2.bf16.msra.mxu0 0
    %839 = vmatprep.subr.bf16.mxu0 0
    %840 = vmatpush2.bf16.msra.mxu0 0
    %841 = vmatprep.subr.bf16.mxu0 0
    %842 = vmatpush2.bf16.msra.mxu0 0
    %843 = vmatprep.subr.bf16.mxu0 0
    %844 = vmatpush2.bf16.msra.mxu0 0
    %845 = vmatprep.subr.bf16.mxu0 0
    %846 = vmatpush2.bf16.msra.mxu0 0
    %847 = vmatprep.subr.bf16.mxu0 0
    %848 = vmatpush2.bf16.msra.mxu0 0
    %849 = vmatprep.subr.bf16.mxu0 0
    %850 = vmatpush2.bf16.msra.mxu0 0
    %851 = vmatprep.mubr.bf16.mxu0 0
    %852 = vmatmul.mubr.bf16.gmra.mxu0 %v673
    %v853 = vpop.f32.mrf.mxu0
    %v854 = vadd.f32 0.0, %v853
    %v855 = vpop.f32.mrf.mxu0
    %v856 = vpop.f32.mrf.mxu0
    %v857 = vpop.f32.mrf.mxu0
    %858 = vdwg.mxu0
    %v859 = vadd.f32 %v164, %v854
    %v860 = vtanh.pop %v859
    %v861 = vpack.c.bf16 %v860, %v860
    %v863 = vsel %vm221, %v861, 0
    %865 = vmatprep.subr.bf16.mxu0 0
    %866 = vmatpush1.bf16.msra.mxu0 0
    %867 = vmatprep.subr.bf16.mxu0 0
    %868 = vmatpush1.bf16.msra.mxu0 0
    %869 = vmatprep.subr.bf16.mxu0 0
    %870 = vmatpush1.bf16.msra.mxu0 0
    %871 = vmatprep.subr.bf16.mxu0 0
    %872 = vmatpush1.bf16.msra.mxu0 0
    %873 = vmatprep.subr.bf16.mxu0 0
    %874 = vmatpush1.bf16.msra.mxu0 0
    %875 = vmatprep.subr.bf16.mxu0 0
    %876 = vmatpush1.bf16.msra.mxu0 0
    %877 = vmatprep.subr.bf16.mxu0 0
    %878 = vmatpush1.bf16.msra.mxu0 %v277
    %879 = vmatprep.subr.bf16.mxu0 0
    %880 = vmatpush1.bf16.msra.mxu0 %v276
    %881 = vmatprep.subr.bf16.mxu0 0
    %882 = vmatpush2.bf16.msra.mxu0 0
    %883 = vmatprep.subr.bf16.mxu0 0
    %884 = vmatpush2.bf16.msra.mxu0 0
    %885 = vmatprep.subr.bf16.mxu0 0
    %886 = vmatpush2.bf16.msra.mxu0 0
    %887 = vmatprep.subr.bf16.mxu0 0
    %888 = vmatpush2.bf16.msra.mxu0 0
    %889 = vmatprep.subr.bf16.mxu0 0
    %890 = vmatpush2.bf16.msra.mxu0 0
    %891 = vmatprep.subr.bf16.mxu0 0
    %892 = vmatpush2.bf16.msra.mxu0 0
    %893 = vmatprep.subr.bf16.mxu0 0
    %894 = vmatpush2.bf16.msra.mxu0 0
    %895 = vmatprep.subr.bf16.mxu0 0
    %896 = vmatpush2.bf16.msra.mxu0 0
    %897 = vmatprep.mubr.bf16.mxu0 0
    %898 = vmatmul.mubr.bf16.gmra.mxu0 %v863
    %v899 = vpop.f32.mrf.mxu0
    %v900 = vadd.f32 0.0, %v899
    %v901 = vpop.f32.mrf.mxu0
    %v902 = vpop.f32.mrf.mxu0
    %v903 = vpop.f32.mrf.mxu0
    %904 = vdwg.mxu0
    %v905 = vadd.f32 %v200, %v900
    %906 = vmatprep.subr.bf16.mxu0 0
    %907 = vmatpush1.bf16.msra.mxu0 0
    %908 = vmatprep.subr.bf16.mxu0 0
    %909 = vmatpush1.bf16.msra.mxu0 0
    %910 = vmatprep.subr.bf16.mxu0 0
    %911 = vmatpush1.bf16.msra.mxu0 0
    %912 = vmatprep.subr.bf16.mxu0 0
    %913 = vmatpush1.bf16.msra.mxu0 0
    %914 = vmatprep.subr.bf16.mxu0 0
    %915 = vmatpush1.bf16.msra.mxu0 0
    %916 = vmatprep.subr.bf16.mxu0 0
    %917 = vmatpush1.bf16.msra.mxu0 0
    %918 = vmatprep.subr.bf16.mxu0 0
    %919 = vmatpush1.bf16.msra.mxu0 %v333
    %920 = vmatprep.subr.bf16.mxu0 0
    %921 = vmatpush1.bf16.msra.mxu0 %v332
    %922 = vmatprep.subr.bf16.mxu0 0
    %923 = vmatpush2.bf16.msra.mxu0 0
    %924 = vmatprep.subr.bf16.mxu0 0
    %925 = vmatpush2.bf16.msra.mxu0 0
    %926 = vmatprep.subr.bf16.mxu0 0
    %927 = vmatpush2.bf16.msra.mxu0 0
    %928 = vmatprep.subr.bf16.mxu0 0
    %929 = vmatpush2.bf16.msra.mxu0 0
    %930 = vmatprep.subr.bf16.mxu0 0
    %931 = vmatpush2.bf16.msra.mxu0 0
    %932 = vmatprep.subr.bf16.mxu0 0
    %933 = vmatpush2.bf16.msra.mxu0 0
    %934 = vmatprep.subr.bf16.mxu0 0
    %935 = vmatpush2.bf16.msra.mxu0 0
    %936 = vmatprep.subr.bf16.mxu0 0
    %937 = vmatpush2.bf16.msra.mxu0 0
    %938 = vmatprep.mubr.bf16.mxu0 0
    %939 = vmatmul.mubr.bf16.gmra.mxu0 %v776
    %v940 = vpop.f32.mrf.mxu0
    %v941 = vadd.f32 0.0, %v940
    %v942 = vpop.f32.mrf.mxu0
    %v943 = vpop.f32.mrf.mxu0
    %v944 = vpop.f32.mrf.mxu0
    %945 = vdwg.mxu0
    %v946 = vadd.f32 %v905, %v941
    %v947 = vtanh.pop %v946
    %v948 = vpack.c.bf16 %v947, %v947
    %v949 = vld [vmem:[#allocation5 + $0x30] sm:$0xf]
    %v950 = vld [vmem:[#allocation5 + $0x34] sm:$0xf]
    %v951 = vld [vmem:[#allocation5 + $0x38] sm:$0xf]
    %v952 = vld [vmem:[#allocation5 + $0x3c] sm:$0xf]
    %v957 = vunpack.c.l.b16 %v949
    %v958 = vunpack.c.l.b16 %v950
    %v959 = vunpack.c.l.b16 %v951
    %v960 = vunpack.c.l.b16 %v952
    %v961 = vpack.c.b16 %v958, %v957
    %v962 = vpack.c.b16 %v960, %v959
    %v966 = vsel %vm221, %v948, 0
    %968 = vmatprep.subr.bf16.mxu0 0
    %969 = vmatpush1.bf16.msra.mxu0 0
    %970 = vmatprep.subr.bf16.mxu0 0
    %971 = vmatpush1.bf16.msra.mxu0 0
    %972 = vmatprep.subr.bf16.mxu0 0
    %973 = vmatpush1.bf16.msra.mxu0 0
    %974 = vmatprep.subr.bf16.mxu0 0
    %975 = vmatpush1.bf16.msra.mxu0 0
    %976 = vmatprep.subr.bf16.mxu0 0
    %977 = vmatpush1.bf16.msra.mxu0 0
    %978 = vmatprep.subr.bf16.mxu0 0
    %979 = vmatpush1.bf16.msra.mxu0 0
    %980 = vmatprep.subr.bf16.mxu0 0
    %981 = vmatpush1.bf16.msra.mxu0 %v962
    %982 = vmatprep.subr.bf16.mxu0 0
    %983 = vmatpush1.bf16.msra.mxu0 %v961
    %984 = vmatprep.subr.bf16.mxu0 0
    %985 = vmatpush2.bf16.msra.mxu0 0
    %986 = vmatprep.subr.bf16.mxu0 0
    %987 = vmatpush2.bf16.msra.mxu0 0
    %988 = vmatprep.subr.bf16.mxu0 0
    %989 = vmatpush2.bf16.msra.mxu0 0
    %990 = vmatprep.subr.bf16.mxu0 0
    %991 = vmatpush2.bf16.msra.mxu0 0
    %992 = vmatprep.subr.bf16.mxu0 0
    %993 = vmatpush2.bf16.msra.mxu0 0
    %994 = vmatprep.subr.bf16.mxu0 0
    %995 = vmatpush2.bf16.msra.mxu0 0
    %996 = vmatprep.subr.bf16.mxu0 0
    %997 = vmatpush2.bf16.msra.mxu0 0
    %998 = vmatprep.subr.bf16.mxu0 0
    %999 = vmatpush2.bf16.msra.mxu0 0
    %1000 = vmatprep.mubr.bf16.mxu0 0
    %1001 = vmatmul.mubr.bf16.gmra.mxu0 %v966
    %v1002 = vpop.f32.mrf.mxu0
    %v1003 = vadd.f32 0.0, %v1002
    %v1004 = vpop.f32.mrf.mxu0
    %v1005 = vpop.f32.mrf.mxu0
    %v1006 = vpop.f32.mrf.mxu0
    %1007 = vdwg.mxu0
    %v1008 = vadd.f32 %v818, %v1003
    %1009 = vmatprep.subr.bf16.mxu0 0
    %1010 = vmatpush1.bf16.msra.mxu0 0
    %1011 = vmatprep.subr.bf16.mxu0 0
    %1012 = vmatpush1.bf16.msra.mxu0 0
    %1013 = vmatprep.subr.bf16.mxu0 0
    %1014 = vmatpush1.bf16.msra.mxu0 0
    %1015 = vmatprep.subr.bf16.mxu0 0
    %1016 = vmatpush1.bf16.msra.mxu0 0
    %1017 = vmatprep.subr.bf16.mxu0 0
    %1018 = vmatpush1.bf16.msra.mxu0 0
    %1019 = vmatprep.subr.bf16.mxu0 0
    %1020 = vmatpush1.bf16.msra.mxu0 0
    %1021 = vmatprep.subr.bf16.mxu0 0
    %1022 = vmatpush1.bf16.msra.mxu0 %v218
    %1023 = vmatprep.subr.bf16.mxu0 0
    %1024 = vmatpush1.bf16.msra.mxu0 %v217
    %1025 = vmatprep.subr.bf16.mxu0 0
    %1026 = vmatpush2.bf16.msra.mxu0 0
    %1027 = vmatprep.subr.bf16.mxu0 0
    %1028 = vmatpush2.bf16.msra.mxu0 0
    %1029 = vmatprep.subr.bf16.mxu0 0
    %1030 = vmatpush2.bf16.msra.mxu0 0
    %1031 = vmatprep.subr.bf16.mxu0 0
    %1032 = vmatpush2.bf16.msra.mxu0 0
    %1033 = vmatprep.subr.bf16.mxu0 0
    %1034 = vmatpush2.bf16.msra.mxu0 0
    %1035 = vmatprep.subr.bf16.mxu0 0
    %1036 = vmatpush2.bf16.msra.mxu0 0
    %1037 = vmatprep.subr.bf16.mxu0 0
    %1038 = vmatpush2.bf16.msra.mxu0 0
    %1039 = vmatprep.subr.bf16.mxu0 0
    %1040 = vmatpush2.bf16.msra.mxu0 0
    %1041 = vmatprep.mubr.bf16.mxu0 0
    %1042 = vmatmul.mubr.bf16.gmra.mxu0 %v863
    %v1043 = vpop.f32.mrf.mxu0
    %v1044 = vadd.f32 0.0, %v1043
    %v1045 = vpop.f32.mrf.mxu0
    %v1046 = vpop.f32.mrf.mxu0
    %v1047 = vpop.f32.mrf.mxu0
    %1048 = vdwg.mxu0
    %v1049 = vadd.f32 %v169, %v1044
    %v1050 = vtanh.pop %v1049
    %v1051 = vpack.c.bf16 %v1050, %v1050
    %v1053 = vsel %vm221, %v1051, 0
    %1055 = vmatprep.subr.bf16.mxu0 0
    %1056 = vmatpush1.bf16.msra.mxu0 0
    %1057 = vmatprep.subr.bf16.mxu0 0
    %1058 = vmatpush1.bf16.msra.mxu0 0
    %1059 = vmatprep.subr.bf16.mxu0 0
    %1060 = vmatpush1.bf16.msra.mxu0 0
    %1061 = vmatprep.subr.bf16.mxu0 0
    %1062 = vmatpush1.bf16.msra.mxu0 0
    %1063 = vmatprep.subr.bf16.mxu0 0
    %1064 = vmatpush1.bf16.msra.mxu0 0
    %1065 = vmatprep.subr.bf16.mxu0 0
    %1066 = vmatpush1.bf16.msra.mxu0 0
    %1067 = vmatprep.subr.bf16.mxu0 0
    %1068 = vmatpush1.bf16.msra.mxu0 %v277
    %1069 = vmatprep.subr.bf16.mxu0 0
    %1070 = vmatpush1.bf16.msra.mxu0 %v276
    %1071 = vmatprep.subr.bf16.mxu0 0
    %1072 = vmatpush2.bf16.msra.mxu0 0
    %1073 = vmatprep.subr.bf16.mxu0 0
    %1074 = vmatpush2.bf16.msra.mxu0 0
    %1075 = vmatprep.subr.bf16.mxu0 0
    %1076 = vmatpush2.bf16.msra.mxu0 0
    %1077 = vmatprep.subr.bf16.mxu0 0
    %1078 = vmatpush2.bf16.msra.mxu0 0
    %1079 = vmatprep.subr.bf16.mxu0 0
    %1080 = vmatpush2.bf16.msra.mxu0 0
    %1081 = vmatprep.subr.bf16.mxu0 0
    %1082 = vmatpush2.bf16.msra.mxu0 0
    %1083 = vmatprep.subr.bf16.mxu0 0
    %1084 = vmatpush2.bf16.msra.mxu0 0
    %1085 = vmatprep.subr.bf16.mxu0 0
    %1086 = vmatpush2.bf16.msra.mxu0 0
    %1087 = vmatprep.mubr.bf16.mxu0 0
    %1088 = vmatmul.mubr.bf16.gmra.mxu0 %v1053
    %v1089 = vpop.f32.mrf.mxu0
    %v1090 = vadd.f32 0.0, %v1089
    %v1091 = vpop.f32.mrf.mxu0
    %v1092 = vpop.f32.mrf.mxu0
    %v1093 = vpop.f32.mrf.mxu0
    %1094 = vdwg.mxu0
    %v1095 = vadd.f32 %v200, %v1090
    %1096 = vmatprep.subr.bf16.mxu0 0
    %1097 = vmatpush1.bf16.msra.mxu0 0
    %1098 = vmatprep.subr.bf16.mxu0 0
    %1099 = vmatpush1.bf16.msra.mxu0 0
    %1100 = vmatprep.subr.bf16.mxu0 0
    %1101 = vmatpush1.bf16.msra.mxu0 0
    %1102 = vmatprep.subr.bf16.mxu0 0
    %1103 = vmatpush1.bf16.msra.mxu0 0
    %1104 = vmatprep.subr.bf16.mxu0 0
    %1105 = vmatpush1.bf16.msra.mxu0 0
    %1106 = vmatprep.subr.bf16.mxu0 0
    %1107 = vmatpush1.bf16.msra.mxu0 0
    %1108 = vmatprep.subr.bf16.mxu0 0
    %1109 = vmatpush1.bf16.msra.mxu0 %v333
    %1110 = vmatprep.subr.bf16.mxu0 0
    %1111 = vmatpush1.bf16.msra.mxu0 %v332
    %1112 = vmatprep.subr.bf16.mxu0 0
    %1113 = vmatpush2.bf16.msra.mxu0 0
    %1114 = vmatprep.subr.bf16.mxu0 0
    %1115 = vmatpush2.bf16.msra.mxu0 0
    %1116 = vmatprep.subr.bf16.mxu0 0
    %1117 = vmatpush2.bf16.msra.mxu0 0
    %1118 = vmatprep.subr.bf16.mxu0 0
    %1119 = vmatpush2.bf16.msra.mxu0 0
    %1120 = vmatprep.subr.bf16.mxu0 0
    %1121 = vmatpush2.bf16.msra.mxu0 0
    %1122 = vmatprep.subr.bf16.mxu0 0
    %1123 = vmatpush2.bf16.msra.mxu0 0
    %1124 = vmatprep.subr.bf16.mxu0 0
    %1125 = vmatpush2.bf16.msra.mxu0 0
    %1126 = vmatprep.subr.bf16.mxu0 0
    %1127 = vmatpush2.bf16.msra.mxu0 0
    %1128 = vmatprep.mubr.bf16.mxu0 0
    %1129 = vmatmul.mubr.bf16.gmra.mxu0 %v966
    %v1130 = vpop.f32.mrf.mxu0
    %v1131 = vadd.f32 0.0, %v1130
    %v1132 = vpop.f32.mrf.mxu0
    %v1133 = vpop.f32.mrf.mxu0
    %v1134 = vpop.f32.mrf.mxu0
    %1135 = vdwg.mxu0
    %v1136 = vadd.f32 %v1095, %v1131
    %v1137 = vtanh.pop %v1136
    %v1138 = vpack.c.bf16 %v1137, %v1137
    %v1139 = vld [vmem:[#allocation5 + $0x40] sm:$0xf]
    %v1140 = vld [vmem:[#allocation5 + $0x44] sm:$0xf]
    %v1141 = vld [vmem:[#allocation5 + $0x48] sm:$0xf]
    %v1142 = vld [vmem:[#allocation5 + $0x4c] sm:$0xf]
    %v1147 = vunpack.c.l.b16 %v1139
    %v1148 = vunpack.c.l.b16 %v1140
    %v1149 = vunpack.c.l.b16 %v1141
    %v1150 = vunpack.c.l.b16 %v1142
    %v1151 = vpack.c.b16 %v1148, %v1147
    %v1152 = vpack.c.b16 %v1150, %v1149
    %v1156 = vsel %vm221, %v1138, 0
    %1158 = vmatprep.subr.bf16.mxu0 0
    %1159 = vmatpush1.bf16.msra.mxu0 0
    %1160 = vmatprep.subr.bf16.mxu0 0
    %1161 = vmatpush1.bf16.msra.mxu0 0
    %1162 = vmatprep.subr.bf16.mxu0 0
    %1163 = vmatpush1.bf16.msra.mxu0 0
    %1164 = vmatprep.subr.bf16.mxu0 0
    %1165 = vmatpush1.bf16.msra.mxu0 0
    %1166 = vmatprep.subr.bf16.mxu0 0
    %1167 = vmatpush1.bf16.msra.mxu0 0
    %1168 = vmatprep.subr.bf16.mxu0 0
    %1169 = vmatpush1.bf16.msra.mxu0 0
    %1170 = vmatprep.subr.bf16.mxu0 0
    %1171 = vmatpush1.bf16.msra.mxu0 %v1152
    %1172 = vmatprep.subr.bf16.mxu0 0
    %1173 = vmatpush1.bf16.msra.mxu0 %v1151
    %1174 = vmatprep.subr.bf16.mxu0 0
    %1175 = vmatpush2.bf16.msra.mxu0 0
    %1176 = vmatprep.subr.bf16.mxu0 0
    %1177 = vmatpush2.bf16.msra.mxu0 0
    %1178 = vmatprep.subr.bf16.mxu0 0
    %1179 = vmatpush2.bf16.msra.mxu0 0
    %1180 = vmatprep.subr.bf16.mxu0 0
    %1181 = vmatpush2.bf16.msra.mxu0 0
    %1182 = vmatprep.subr.bf16.mxu0 0
    %1183 = vmatpush2.bf16.msra.mxu0 0
    %1184 = vmatprep.subr.bf16.mxu0 0
    %1185 = vmatpush2.bf16.msra.mxu0 0
    %1186 = vmatprep.subr.bf16.mxu0 0
    %1187 = vmatpush2.bf16.msra.mxu0 0
    %1188 = vmatprep.subr.bf16.mxu0 0
    %1189 = vmatpush2.bf16.msra.mxu0 0
    %1190 = vmatprep.mubr.bf16.mxu0 0
    %1191 = vmatmul.mubr.bf16.gmra.mxu0 %v1156
    %v1192 = vpop.f32.mrf.mxu0
    %v1193 = vadd.f32 0.0, %v1192
    %v1194 = vpop.f32.mrf.mxu0
    %v1195 = vpop.f32.mrf.mxu0
    %v1196 = vpop.f32.mrf.mxu0
    %1197 = vdwg.mxu0
    %v1198 = vadd.f32 %v1008, %v1193
    %1199 = vmatprep.subr.bf16.mxu0 0
    %1200 = vmatpush1.bf16.msra.mxu0 0
    %1201 = vmatprep.subr.bf16.mxu0 0
    %1202 = vmatpush1.bf16.msra.mxu0 0
    %1203 = vmatprep.subr.bf16.mxu0 0
    %1204 = vmatpush1.bf16.msra.mxu0 0
    %1205 = vmatprep.subr.bf16.mxu0 0
    %1206 = vmatpush1.bf16.msra.mxu0 0
    %1207 = vmatprep.subr.bf16.mxu0 0
    %1208 = vmatpush1.bf16.msra.mxu0 0
    %1209 = vmatprep.subr.bf16.mxu0 0
    %1210 = vmatpush1.bf16.msra.mxu0 0
    %1211 = vmatprep.subr.bf16.mxu0 0
    %1212 = vmatpush1.bf16.msra.mxu0 %v218
    %1213 = vmatprep.subr.bf16.mxu0 0
    %1214 = vmatpush1.bf16.msra.mxu0 %v217
    %1215 = vmatprep.subr.bf16.mxu0 0
    %1216 = vmatpush2.bf16.msra.mxu0 0
    %1217 = vmatprep.subr.bf16.mxu0 0
    %1218 = vmatpush2.bf16.msra.mxu0 0
    %1219 = vmatprep.subr.bf16.mxu0 0
    %1220 = vmatpush2.bf16.msra.mxu0 0
    %1221 = vmatprep.subr.bf16.mxu0 0
    %1222 = vmatpush2.bf16.msra.mxu0 0
    %1223 = vmatprep.subr.bf16.mxu0 0
    %1224 = vmatpush2.bf16.msra.mxu0 0
    %1225 = vmatprep.subr.bf16.mxu0 0
    %1226 = vmatpush2.bf16.msra.mxu0 0
    %1227 = vmatprep.subr.bf16.mxu0 0
    %1228 = vmatpush2.bf16.msra.mxu0 0
    %1229 = vmatprep.subr.bf16.mxu0 0
    %1230 = vmatpush2.bf16.msra.mxu0 0
    %1231 = vmatprep.mubr.bf16.mxu0 0
    %1232 = vmatmul.mubr.bf16.gmra.mxu0 %v1053
    %v1233 = vpop.f32.mrf.mxu0
    %v1234 = vadd.f32 0.0, %v1233
    %v1235 = vpop.f32.mrf.mxu0
    %v1236 = vpop.f32.mrf.mxu0
    %v1237 = vpop.f32.mrf.mxu0
    %1238 = vdwg.mxu0
    %v1239 = vadd.f32 %v172, %v1234
    %v1240 = vtanh.pop %v1239
    %v1241 = vpack.c.bf16 %v1240, %v1240
    %v1243 = vsel %vm221, %v1241, 0
    %1245 = vmatprep.subr.bf16.mxu0 0
    %1246 = vmatpush1.bf16.msra.mxu0 0
    %1247 = vmatprep.subr.bf16.mxu0 0
    %1248 = vmatpush1.bf16.msra.mxu0 0
    %1249 = vmatprep.subr.bf16.mxu0 0
    %1250 = vmatpush1.bf16.msra.mxu0 0
    %1251 = vmatprep.subr.bf16.mxu0 0
    %1252 = vmatpush1.bf16.msra.mxu0 0
    %1253 = vmatprep.subr.bf16.mxu0 0
    %1254 = vmatpush1.bf16.msra.mxu0 0
    %1255 = vmatprep.subr.bf16.mxu0 0
    %1256 = vmatpush1.bf16.msra.mxu0 0
    %1257 = vmatprep.subr.bf16.mxu0 0
    %1258 = vmatpush1.bf16.msra.mxu0 %v277
    %1259 = vmatprep.subr.bf16.mxu0 0
    %1260 = vmatpush1.bf16.msra.mxu0 %v276
    %1261 = vmatprep.subr.bf16.mxu0 0
    %1262 = vmatpush2.bf16.msra.mxu0 0
    %1263 = vmatprep.subr.bf16.mxu0 0
    %1264 = vmatpush2.bf16.msra.mxu0 0
    %1265 = vmatprep.subr.bf16.mxu0 0
    %1266 = vmatpush2.bf16.msra.mxu0 0
    %1267 = vmatprep.subr.bf16.mxu0 0
    %1268 = vmatpush2.bf16.msra.mxu0 0
    %1269 = vmatprep.subr.bf16.mxu0 0
    %1270 = vmatpush2.bf16.msra.mxu0 0
    %1271 = vmatprep.subr.bf16.mxu0 0
    %1272 = vmatpush2.bf16.msra.mxu0 0
    %1273 = vmatprep.subr.bf16.mxu0 0
    %1274 = vmatpush2.bf16.msra.mxu0 0
    %1275 = vmatprep.subr.bf16.mxu0 0
    %1276 = vmatpush2.bf16.msra.mxu0 0
    %1277 = vmatprep.mubr.bf16.mxu0 0
    %1278 = vmatmul.mubr.bf16.gmra.mxu0 %v1243
    %v1279 = vpop.f32.mrf.mxu0
    %v1280 = vadd.f32 0.0, %v1279
    %v1281 = vpop.f32.mrf.mxu0
    %v1282 = vpop.f32.mrf.mxu0
    %v1283 = vpop.f32.mrf.mxu0
    %1284 = vdwg.mxu0
    %v1285 = vadd.f32 %v200, %v1280
    %1286 = vmatprep.subr.bf16.mxu0 0
    %1287 = vmatpush1.bf16.msra.mxu0 0
    %1288 = vmatprep.subr.bf16.mxu0 0
    %1289 = vmatpush1.bf16.msra.mxu0 0
    %1290 = vmatprep.subr.bf16.mxu0 0
    %1291 = vmatpush1.bf16.msra.mxu0 0
    %1292 = vmatprep.subr.bf16.mxu0 0
    %1293 = vmatpush1.bf16.msra.mxu0 0
    %1294 = vmatprep.subr.bf16.mxu0 0
    %1295 = vmatpush1.bf16.msra.mxu0 0
    %1296 = vmatprep.subr.bf16.mxu0 0
    %1297 = vmatpush1.bf16.msra.mxu0 0
    %1298 = vmatprep.subr.bf16.mxu0 0
    %1299 = vmatpush1.bf16.msra.mxu0 %v333
    %1300 = vmatprep.subr.bf16.mxu0 0
    %1301 = vmatpush1.bf16.msra.mxu0 %v332
    %1302 = vmatprep.subr.bf16.mxu0 0
    %1303 = vmatpush2.bf16.msra.mxu0 0
    %1304 = vmatprep.subr.bf16.mxu0 0
    %1305 = vmatpush2.bf16.msra.mxu0 0
    %1306 = vmatprep.subr.bf16.mxu0 0
    %1307 = vmatpush2.bf16.msra.mxu0 0
    %1308 = vmatprep.subr.bf16.mxu0 0
    %1309 = vmatpush2.bf16.msra.mxu0 0
    %1310 = vmatprep.subr.bf16.mxu0 0
    %1311 = vmatpush2.bf16.msra.mxu0 0
    %1312 = vmatprep.subr.bf16.mxu0 0
    %1313 = vmatpush2.bf16.msra.mxu0 0
    %1314 = vmatprep.subr.bf16.mxu0 0
    %1315 = vmatpush2.bf16.msra.mxu0 0
    %1316 = vmatprep.subr.bf16.mxu0 0
    %1317 = vmatpush2.bf16.msra.mxu0 0
    %1318 = vmatprep.mubr.bf16.mxu0 0
    %1319 = vmatmul.mubr.bf16.gmra.mxu0 %v1156
    %v1320 = vpop.f32.mrf.mxu0
    %v1321 = vadd.f32 0.0, %v1320
    %v1322 = vpop.f32.mrf.mxu0
    %v1323 = vpop.f32.mrf.mxu0
    %v1324 = vpop.f32.mrf.mxu0
    %1325 = vdwg.mxu0
    %v1326 = vadd.f32 %v1285, %v1321
    %v1327 = vtanh.pop %v1326
    %v1328 = vpack.c.bf16 %v1327, %v1327
    %v1329 = vld [vmem:[#allocation5 + $0x50] sm:$0xf]
    %v1330 = vld [vmem:[#allocation5 + $0x54] sm:$0xf]
    %v1331 = vld [vmem:[#allocation5 + $0x58] sm:$0xf]
    %v1332 = vld [vmem:[#allocation5 + $0x5c] sm:$0xf]
    %v1337 = vunpack.c.l.b16 %v1329
    %v1338 = vunpack.c.l.b16 %v1330
    %v1339 = vunpack.c.l.b16 %v1331
    %v1340 = vunpack.c.l.b16 %v1332
    %v1341 = vpack.c.b16 %v1338, %v1337
    %v1342 = vpack.c.b16 %v1340, %v1339
    %v1346 = vsel %vm221, %v1328, 0
    %1348 = vmatprep.subr.bf16.mxu0 0
    %1349 = vmatpush1.bf16.msra.mxu0 0
    %1350 = vmatprep.subr.bf16.mxu0 0
    %1351 = vmatpush1.bf16.msra.mxu0 0
    %1352 = vmatprep.subr.bf16.mxu0 0
    %1353 = vmatpush1.bf16.msra.mxu0 0
    %1354 = vmatprep.subr.bf16.mxu0 0
    %1355 = vmatpush1.bf16.msra.mxu0 0
    %1356 = vmatprep.subr.bf16.mxu0 0
    %1357 = vmatpush1.bf16.msra.mxu0 0
    %1358 = vmatprep.subr.bf16.mxu0 0
    %1359 = vmatpush1.bf16.msra.mxu0 0
    %1360 = vmatprep.subr.bf16.mxu0 0
    %1361 = vmatpush1.bf16.msra.mxu0 %v1342
    %1362 = vmatprep.subr.bf16.mxu0 0
    %1363 = vmatpush1.bf16.msra.mxu0 %v1341
    %1364 = vmatprep.subr.bf16.mxu0 0
    %1365 = vmatpush2.bf16.msra.mxu0 0
    %1366 = vmatprep.subr.bf16.mxu0 0
    %1367 = vmatpush2.bf16.msra.mxu0 0
    %1368 = vmatprep.subr.bf16.mxu0 0
    %1369 = vmatpush2.bf16.msra.mxu0 0
    %1370 = vmatprep.subr.bf16.mxu0 0
    %1371 = vmatpush2.bf16.msra.mxu0 0
    %1372 = vmatprep.subr.bf16.mxu0 0
    %1373 = vmatpush2.bf16.msra.mxu0 0
    %1374 = vmatprep.subr.bf16.mxu0 0
    %1375 = vmatpush2.bf16.msra.mxu0 0
    %1376 = vmatprep.subr.bf16.mxu0 0
    %1377 = vmatpush2.bf16.msra.mxu0 0
    %1378 = vmatprep.subr.bf16.mxu0 0
    %1379 = vmatpush2.bf16.msra.mxu0 0
    %1380 = vmatprep.mubr.bf16.mxu0 0
    %1381 = vmatmul.mubr.bf16.gmra.mxu0 %v1346
    %v1382 = vpop.f32.mrf.mxu0
    %v1383 = vadd.f32 0.0, %v1382
    %v1384 = vpop.f32.mrf.mxu0
    %v1385 = vpop.f32.mrf.mxu0
    %v1386 = vpop.f32.mrf.mxu0
    %1387 = vdwg.mxu0
    %v1388 = vadd.f32 %v1198, %v1383
    %1389 = vmatprep.subr.bf16.mxu0 0
    %1390 = vmatpush1.bf16.msra.mxu0 0
    %1391 = vmatprep.subr.bf16.mxu0 0
    %1392 = vmatpush1.bf16.msra.mxu0 0
    %1393 = vmatprep.subr.bf16.mxu0 0
    %1394 = vmatpush1.bf16.msra.mxu0 0
    %1395 = vmatprep.subr.bf16.mxu0 0
    %1396 = vmatpush1.bf16.msra.mxu0 0
    %1397 = vmatprep.subr.bf16.mxu0 0
    %1398 = vmatpush1.bf16.msra.mxu0 0
    %1399 = vmatprep.subr.bf16.mxu0 0
    %1400 = vmatpush1.bf16.msra.mxu0 0
    %1401 = vmatprep.subr.bf16.mxu0 0
    %1402 = vmatpush1.bf16.msra.mxu0 %v218
    %1403 = vmatprep.subr.bf16.mxu0 0
    %1404 = vmatpush1.bf16.msra.mxu0 %v217
    %1405 = vmatprep.subr.bf16.mxu0 0
    %1406 = vmatpush2.bf16.msra.mxu0 0
    %1407 = vmatprep.subr.bf16.mxu0 0
    %1408 = vmatpush2.bf16.msra.mxu0 0
    %1409 = vmatprep.subr.bf16.mxu0 0
    %1410 = vmatpush2.bf16.msra.mxu0 0
    %1411 = vmatprep.subr.bf16.mxu0 0
    %1412 = vmatpush2.bf16.msra.mxu0 0
    %1413 = vmatprep.subr.bf16.mxu0 0
    %1414 = vmatpush2.bf16.msra.mxu0 0
    %1415 = vmatprep.subr.bf16.mxu0 0
    %1416 = vmatpush2.bf16.msra.mxu0 0
    %1417 = vmatprep.subr.bf16.mxu0 0
    %1418 = vmatpush2.bf16.msra.mxu0 0
    %1419 = vmatprep.subr.bf16.mxu0 0
    %1420 = vmatpush2.bf16.msra.mxu0 0
    %1421 = vmatprep.mubr.bf16.mxu0 0
    %1422 = vmatmul.mubr.bf16.gmra.mxu0 %v1243
    %v1423 = vpop.f32.mrf.mxu0
    %v1424 = vadd.f32 0.0, %v1423
    %v1425 = vpop.f32.mrf.mxu0
    %v1426 = vpop.f32.mrf.mxu0
    %v1427 = vpop.f32.mrf.mxu0
    %1428 = vdwg.mxu0
    %v1429 = vadd.f32 %v177, %v1424
    %v1430 = vtanh.pop %v1429
    %v1431 = vpack.c.bf16 %v1430, %v1430
    %v1433 = vsel %vm221, %v1431, 0
    %1435 = vmatprep.subr.bf16.mxu0 0
    %1436 = vmatpush1.bf16.msra.mxu0 0
    %1437 = vmatprep.subr.bf16.mxu0 0
    %1438 = vmatpush1.bf16.msra.mxu0 0
    %1439 = vmatprep.subr.bf16.mxu0 0
    %1440 = vmatpush1.bf16.msra.mxu0 0
    %1441 = vmatprep.subr.bf16.mxu0 0
    %1442 = vmatpush1.bf16.msra.mxu0 0
    %1443 = vmatprep.subr.bf16.mxu0 0
    %1444 = vmatpush1.bf16.msra.mxu0 0
    %1445 = vmatprep.subr.bf16.mxu0 0
    %1446 = vmatpush1.bf16.msra.mxu0 0
    %1447 = vmatprep.subr.bf16.mxu0 0
    %1448 = vmatpush1.bf16.msra.mxu0 %v277
    %1449 = vmatprep.subr.bf16.mxu0 0
    %1450 = vmatpush1.bf16.msra.mxu0 %v276
    %1451 = vmatprep.subr.bf16.mxu0 0
    %1452 = vmatpush2.bf16.msra.mxu0 0
    %1453 = vmatprep.subr.bf16.mxu0 0
    %1454 = vmatpush2.bf16.msra.mxu0 0
    %1455 = vmatprep.subr.bf16.mxu0 0
    %1456 = vmatpush2.bf16.msra.mxu0 0
    %1457 = vmatprep.subr.bf16.mxu0 0
    %1458 = vmatpush2.bf16.msra.mxu0 0
    %1459 = vmatprep.subr.bf16.mxu0 0
    %1460 = vmatpush2.bf16.msra.mxu0 0
    %1461 = vmatprep.subr.bf16.mxu0 0
    %1462 = vmatpush2.bf16.msra.mxu0 0
    %1463 = vmatprep.subr.bf16.mxu0 0
    %1464 = vmatpush2.bf16.msra.mxu0 0
    %1465 = vmatprep.subr.bf16.mxu0 0
    %1466 = vmatpush2.bf16.msra.mxu0 0
    %1467 = vmatprep.mubr.bf16.mxu0 0
    %1468 = vmatmul.mubr.bf16.gmra.mxu0 %v1433
    %v1469 = vpop.f32.mrf.mxu0
    %v1470 = vadd.f32 0.0, %v1469
    %v1471 = vpop.f32.mrf.mxu0
    %v1472 = vpop.f32.mrf.mxu0
    %v1473 = vpop.f32.mrf.mxu0
    %1474 = vdwg.mxu0
    %v1475 = vadd.f32 %v200, %v1470
    %1476 = vmatprep.subr.bf16.mxu0 0
    %1477 = vmatpush1.bf16.msra.mxu0 0
    %1478 = vmatprep.subr.bf16.mxu0 0
    %1479 = vmatpush1.bf16.msra.mxu0 0
    %1480 = vmatprep.subr.bf16.mxu0 0
    %1481 = vmatpush1.bf16.msra.mxu0 0
    %1482 = vmatprep.subr.bf16.mxu0 0
    %1483 = vmatpush1.bf16.msra.mxu0 0
    %1484 = vmatprep.subr.bf16.mxu0 0
    %1485 = vmatpush1.bf16.msra.mxu0 0
    %1486 = vmatprep.subr.bf16.mxu0 0
    %1487 = vmatpush1.bf16.msra.mxu0 0
    %1488 = vmatprep.subr.bf16.mxu0 0
    %1489 = vmatpush1.bf16.msra.mxu0 %v333
    %1490 = vmatprep.subr.bf16.mxu0 0
    %1491 = vmatpush1.bf16.msra.mxu0 %v332
    %1492 = vmatprep.subr.bf16.mxu0 0
    %1493 = vmatpush2.bf16.msra.mxu0 0
    %1494 = vmatprep.subr.bf16.mxu0 0
    %1495 = vmatpush2.bf16.msra.mxu0 0
    %1496 = vmatprep.subr.bf16.mxu0 0
    %1497 = vmatpush2.bf16.msra.mxu0 0
    %1498 = vmatprep.subr.bf16.mxu0 0
    %1499 = vmatpush2.bf16.msra.mxu0 0
    %1500 = vmatprep.subr.bf16.mxu0 0
    %1501 = vmatpush2.bf16.msra.mxu0 0
    %1502 = vmatprep.subr.bf16.mxu0 0
    %1503 = vmatpush2.bf16.msra.mxu0 0
    %1504 = vmatprep.subr.bf16.mxu0 0
    %1505 = vmatpush2.bf16.msra.mxu0 0
    %1506 = vmatprep.subr.bf16.mxu0 0
    %1507 = vmatpush2.bf16.msra.mxu0 0
    %1508 = vmatprep.mubr.bf16.mxu0 0
    %1509 = vmatmul.mubr.bf16.gmra.mxu0 %v1346
    %v1510 = vpop.f32.mrf.mxu0
    %v1511 = vadd.f32 0.0, %v1510
    %v1512 = vpop.f32.mrf.mxu0
    %v1513 = vpop.f32.mrf.mxu0
    %v1514 = vpop.f32.mrf.mxu0
    %1515 = vdwg.mxu0
    %v1516 = vadd.f32 %v1475, %v1511
    %v1517 = vtanh.pop %v1516
    %v1518 = vpack.c.bf16 %v1517, %v1517
    %v1519 = vld [vmem:[#allocation5 + $0x60] sm:$0xf]
    %v1520 = vld [vmem:[#allocation5 + $0x64] sm:$0xf]
    %v1521 = vld [vmem:[#allocation5 + $0x68] sm:$0xf]
    %v1522 = vld [vmem:[#allocation5 + $0x6c] sm:$0xf]
    %v1527 = vunpack.c.l.b16 %v1519
    %v1528 = vunpack.c.l.b16 %v1520
    %v1529 = vunpack.c.l.b16 %v1521
    %v1530 = vunpack.c.l.b16 %v1522
    %v1531 = vpack.c.b16 %v1528, %v1527
    %v1532 = vpack.c.b16 %v1530, %v1529
    %v1536 = vsel %vm221, %v1518, 0
    %1538 = vmatprep.subr.bf16.mxu0 0
    %1539 = vmatpush1.bf16.msra.mxu0 0
    %1540 = vmatprep.subr.bf16.mxu0 0
    %1541 = vmatpush1.bf16.msra.mxu0 0
    %1542 = vmatprep.subr.bf16.mxu0 0
    %1543 = vmatpush1.bf16.msra.mxu0 0
    %1544 = vmatprep.subr.bf16.mxu0 0
    %1545 = vmatpush1.bf16.msra.mxu0 0
    %1546 = vmatprep.subr.bf16.mxu0 0
    %1547 = vmatpush1.bf16.msra.mxu0 0
    %1548 = vmatprep.subr.bf16.mxu0 0
    %1549 = vmatpush1.bf16.msra.mxu0 0
    %1550 = vmatprep.subr.bf16.mxu0 0
    %1551 = vmatpush1.bf16.msra.mxu0 %v1532
    %1552 = vmatprep.subr.bf16.mxu0 0
    %1553 = vmatpush1.bf16.msra.mxu0 %v1531
    %1554 = vmatprep.subr.bf16.mxu0 0
    %1555 = vmatpush2.bf16.msra.mxu0 0
    %1556 = vmatprep.subr.bf16.mxu0 0
    %1557 = vmatpush2.bf16.msra.mxu0 0
    %1558 = vmatprep.subr.bf16.mxu0 0
    %1559 = vmatpush2.bf16.msra.mxu0 0
    %1560 = vmatprep.subr.bf16.mxu0 0
    %1561 = vmatpush2.bf16.msra.mxu0 0
    %1562 = vmatprep.subr.bf16.mxu0 0
    %1563 = vmatpush2.bf16.msra.mxu0 0
    %1564 = vmatprep.subr.bf16.mxu0 0
    %1565 = vmatpush2.bf16.msra.mxu0 0
    %1566 = vmatprep.subr.bf16.mxu0 0
    %1567 = vmatpush2.bf16.msra.mxu0 0
    %1568 = vmatprep.subr.bf16.mxu0 0
    %1569 = vmatpush2.bf16.msra.mxu0 0
    %1570 = vmatprep.mubr.bf16.mxu0 0
    %1571 = vmatmul.mubr.bf16.gmra.mxu0 %v1536
    %v1572 = vpop.f32.mrf.mxu0
    %v1573 = vadd.f32 0.0, %v1572
    %v1574 = vpop.f32.mrf.mxu0
    %v1575 = vpop.f32.mrf.mxu0
    %v1576 = vpop.f32.mrf.mxu0
    %1577 = vdwg.mxu0
    %v1578 = vadd.f32 %v1388, %v1573
    %1579 = vmatprep.subr.bf16.mxu0 0
    %1580 = vmatpush1.bf16.msra.mxu0 0
    %1581 = vmatprep.subr.bf16.mxu0 0
    %1582 = vmatpush1.bf16.msra.mxu0 0
    %1583 = vmatprep.subr.bf16.mxu0 0
    %1584 = vmatpush1.bf16.msra.mxu0 0
    %1585 = vmatprep.subr.bf16.mxu0 0
    %1586 = vmatpush1.bf16.msra.mxu0 0
    %1587 = vmatprep.subr.bf16.mxu0 0
    %1588 = vmatpush1.bf16.msra.mxu0 0
    %1589 = vmatprep.subr.bf16.mxu0 0
    %1590 = vmatpush1.bf16.msra.mxu0 0
    %1591 = vmatprep.subr.bf16.mxu0 0
    %1592 = vmatpush1.bf16.msra.mxu0 %v218
    %1593 = vmatprep.subr.bf16.mxu0 0
    %1594 = vmatpush1.bf16.msra.mxu0 %v217
    %1595 = vmatprep.subr.bf16.mxu0 0
    %1596 = vmatpush2.bf16.msra.mxu0 0
    %1597 = vmatprep.subr.bf16.mxu0 0
    %1598 = vmatpush2.bf16.msra.mxu0 0
    %1599 = vmatprep.subr.bf16.mxu0 0
    %1600 = vmatpush2.bf16.msra.mxu0 0
    %1601 = vmatprep.subr.bf16.mxu0 0
    %1602 = vmatpush2.bf16.msra.mxu0 0
    %1603 = vmatprep.subr.bf16.mxu0 0
    %1604 = vmatpush2.bf16.msra.mxu0 0
    %1605 = vmatprep.subr.bf16.mxu0 0
    %1606 = vmatpush2.bf16.msra.mxu0 0
    %1607 = vmatprep.subr.bf16.mxu0 0
    %1608 = vmatpush2.bf16.msra.mxu0 0
    %1609 = vmatprep.subr.bf16.mxu0 0
    %1610 = vmatpush2.bf16.msra.mxu0 0
    %1611 = vmatprep.mubr.bf16.mxu0 0
    %1612 = vmatmul.mubr.bf16.gmra.mxu0 %v1433
    %v1613 = vpop.f32.mrf.mxu0
    %v1614 = vadd.f32 0.0, %v1613
    %v1615 = vpop.f32.mrf.mxu0
    %v1616 = vpop.f32.mrf.mxu0
    %v1617 = vpop.f32.mrf.mxu0
    %1618 = vdwg.mxu0
    %v1619 = vadd.f32 %v180, %v1614
    %v1620 = vtanh.pop %v1619
    %v1621 = vpack.c.bf16 %v1620, %v1620
    %v1623 = vsel %vm221, %v1621, 0
    %1625 = vmatprep.subr.bf16.mxu0 0
    %1626 = vmatpush1.bf16.msra.mxu0 0
    %1627 = vmatprep.subr.bf16.mxu0 0
    %1628 = vmatpush1.bf16.msra.mxu0 0
    %1629 = vmatprep.subr.bf16.mxu0 0
    %1630 = vmatpush1.bf16.msra.mxu0 0
    %1631 = vmatprep.subr.bf16.mxu0 0
    %1632 = vmatpush1.bf16.msra.mxu0 0
    %1633 = vmatprep.subr.bf16.mxu0 0
    %1634 = vmatpush1.bf16.msra.mxu0 0
    %1635 = vmatprep.subr.bf16.mxu0 0
    %1636 = vmatpush1.bf16.msra.mxu0 0
    %1637 = vmatprep.subr.bf16.mxu0 0
    %1638 = vmatpush1.bf16.msra.mxu0 %v277
    %1639 = vmatprep.subr.bf16.mxu0 0
    %1640 = vmatpush1.bf16.msra.mxu0 %v276
    %1641 = vmatprep.subr.bf16.mxu0 0
    %1642 = vmatpush2.bf16.msra.mxu0 0
    %1643 = vmatprep.subr.bf16.mxu0 0
    %1644 = vmatpush2.bf16.msra.mxu0 0
    %1645 = vmatprep.subr.bf16.mxu0 0
    %1646 = vmatpush2.bf16.msra.mxu0 0
    %1647 = vmatprep.subr.bf16.mxu0 0
    %1648 = vmatpush2.bf16.msra.mxu0 0
    %1649 = vmatprep.subr.bf16.mxu0 0
    %1650 = vmatpush2.bf16.msra.mxu0 0
    %1651 = vmatprep.subr.bf16.mxu0 0
    %1652 = vmatpush2.bf16.msra.mxu0 0
    %1653 = vmatprep.subr.bf16.mxu0 0
    %1654 = vmatpush2.bf16.msra.mxu0 0
    %1655 = vmatprep.subr.bf16.mxu0 0
    %1656 = vmatpush2.bf16.msra.mxu0 0
    %1657 = vmatprep.mubr.bf16.mxu0 0
    %1658 = vmatmul.mubr.bf16.gmra.mxu0 %v1623
    %v1659 = vpop.f32.mrf.mxu0
    %v1660 = vadd.f32 0.0, %v1659
    %v1661 = vpop.f32.mrf.mxu0
    %v1662 = vpop.f32.mrf.mxu0
    %v1663 = vpop.f32.mrf.mxu0
    %1664 = vdwg.mxu0
    %v1665 = vadd.f32 %v200, %v1660
    %1666 = vmatprep.subr.bf16.mxu0 0
    %1667 = vmatpush1.bf16.msra.mxu0 0
    %1668 = vmatprep.subr.bf16.mxu0 0
    %1669 = vmatpush1.bf16.msra.mxu0 0
    %1670 = vmatprep.subr.bf16.mxu0 0
    %1671 = vmatpush1.bf16.msra.mxu0 0
    %1672 = vmatprep.subr.bf16.mxu0 0
    %1673 = vmatpush1.bf16.msra.mxu0 0
    %1674 = vmatprep.subr.bf16.mxu0 0
    %1675 = vmatpush1.bf16.msra.mxu0 0
    %1676 = vmatprep.subr.bf16.mxu0 0
    %1677 = vmatpush1.bf16.msra.mxu0 0
    %1678 = vmatprep.subr.bf16.mxu0 0
    %1679 = vmatpush1.bf16.msra.mxu0 %v333
    %1680 = vmatprep.subr.bf16.mxu0 0
    %1681 = vmatpush1.bf16.msra.mxu0 %v332
    %1682 = vmatprep.subr.bf16.mxu0 0
    %1683 = vmatpush2.bf16.msra.mxu0 0
    %1684 = vmatprep.subr.bf16.mxu0 0
    %1685 = vmatpush2.bf16.msra.mxu0 0
    %1686 = vmatprep.subr.bf16.mxu0 0
    %1687 = vmatpush2.bf16.msra.mxu0 0
    %1688 = vmatprep.subr.bf16.mxu0 0
    %1689 = vmatpush2.bf16.msra.mxu0 0
    %1690 = vmatprep.subr.bf16.mxu0 0
    %1691 = vmatpush2.bf16.msra.mxu0 0
    %1692 = vmatprep.subr.bf16.mxu0 0
    %1693 = vmatpush2.bf16.msra.mxu0 0
    %1694 = vmatprep.subr.bf16.mxu0 0
    %1695 = vmatpush2.bf16.msra.mxu0 0
    %1696 = vmatprep.subr.bf16.mxu0 0
    %1697 = vmatpush2.bf16.msra.mxu0 0
    %1698 = vmatprep.mubr.bf16.mxu0 0
    %1699 = vmatmul.mubr.bf16.gmra.mxu0 %v1536
    %v1700 = vpop.f32.mrf.mxu0
    %v1701 = vadd.f32 0.0, %v1700
    %v1702 = vpop.f32.mrf.mxu0
    %v1703 = vpop.f32.mrf.mxu0
    %v1704 = vpop.f32.mrf.mxu0
    %1705 = vdwg.mxu0
    %v1706 = vadd.f32 %v1665, %v1701
    %v1707 = vtanh.pop %v1706
    %v1708 = vpack.c.bf16 %v1707, %v1707
    %v1709 = vld [vmem:[#allocation5 + $0x70] sm:$0xf]
    %v1710 = vld [vmem:[#allocation5 + $0x74] sm:$0xf]
    %v1711 = vld [vmem:[#allocation5 + $0x78] sm:$0xf]
    %v1712 = vld [vmem:[#allocation5 + $0x7c] sm:$0xf]
    %v1717 = vunpack.c.l.b16 %v1709
    %v1718 = vunpack.c.l.b16 %v1710
    %v1719 = vunpack.c.l.b16 %v1711
    %v1720 = vunpack.c.l.b16 %v1712
    %v1721 = vpack.c.b16 %v1718, %v1717
    %v1722 = vpack.c.b16 %v1720, %v1719
    %v1726 = vsel %vm221, %v1708, 0
    %1728 = vmatprep.subr.bf16.mxu0 0
    %1729 = vmatpush1.bf16.msra.mxu0 0
    %1730 = vmatprep.subr.bf16.mxu0 0
    %1731 = vmatpush1.bf16.msra.mxu0 0
    %1732 = vmatprep.subr.bf16.mxu0 0
    %1733 = vmatpush1.bf16.msra.mxu0 0
    %1734 = vmatprep.subr.bf16.mxu0 0
    %1735 = vmatpush1.bf16.msra.mxu0 0
    %1736 = vmatprep.subr.bf16.mxu0 0
    %1737 = vmatpush1.bf16.msra.mxu0 0
    %1738 = vmatprep.subr.bf16.mxu0 0
    %1739 = vmatpush1.bf16.msra.mxu0 0
    %1740 = vmatprep.subr.bf16.mxu0 0
    %1741 = vmatpush1.bf16.msra.mxu0 %v1722
    %1742 = vmatprep.subr.bf16.mxu0 0
    %1743 = vmatpush1.bf16.msra.mxu0 %v1721
    %1744 = vmatprep.subr.bf16.mxu0 0
    %1745 = vmatpush2.bf16.msra.mxu0 0
    %1746 = vmatprep.subr.bf16.mxu0 0
    %1747 = vmatpush2.bf16.msra.mxu0 0
    %1748 = vmatprep.subr.bf16.mxu0 0
    %1749 = vmatpush2.bf16.msra.mxu0 0
    %1750 = vmatprep.subr.bf16.mxu0 0
    %1751 = vmatpush2.bf16.msra.mxu0 0
    %1752 = vmatprep.subr.bf16.mxu0 0
    %1753 = vmatpush2.bf16.msra.mxu0 0
    %1754 = vmatprep.subr.bf16.mxu0 0
    %1755 = vmatpush2.bf16.msra.mxu0 0
    %1756 = vmatprep.subr.bf16.mxu0 0
    %1757 = vmatpush2.bf16.msra.mxu0 0
    %1758 = vmatprep.subr.bf16.mxu0 0
    %1759 = vmatpush2.bf16.msra.mxu0 0
    %1760 = vmatprep.mubr.bf16.mxu0 0
    %1761 = vmatmul.mubr.bf16.gmra.mxu0 %v1726
    %v1762 = vpop.f32.mrf.mxu0
    %v1763 = vadd.f32 0.0, %v1762
    %v1764 = vpop.f32.mrf.mxu0
    %v1765 = vpop.f32.mrf.mxu0
    %v1766 = vpop.f32.mrf.mxu0
    %1767 = vdwg.mxu0
    %v1768 = vadd.f32 %v1578, %v1763
    %1769 = vst [vmem:[#allocation7] sm:$0xff] %v1768
    // Predicated region
    $region46: #{tpu_custom_call.1} parent=1 // pred_check
      _
    $region47: #{tpu_custom_call.1} parent=1 // pred_check_branch
      %1771 = sbr.rel (0) target = $region49
    $region48: #{tpu_custom_call.1} parent=1 // pred_region
      %s1773 = ssub.s32 128, 128
      %1774 = vsyncadd [#allocation4], %s1773
      %s1776 = sshll.u32 [#allocation7], 4
      %s1777 = int_to_ptr.vmem [resolvable:$true] %s1776
      %1779 = dma.vmem_to_hbm [thread:$0]  %s1777, 128, %s9, [#allocation4]
    $region49: #{tpu_custom_call.1} parent=1 // pred_fallthru
      _
    // Predicated region
    $region50: #{tpu_custom_call.1} parent=1 // pred_check
      _
    $region51: #{tpu_custom_call.1} parent=1 // pred_check_branch
      %1781 = sbr.rel (0) target = $region53
    $region52: #{tpu_custom_call.1} parent=1 // pred_region
      %1782 = dma.done [#allocation4], 128
    $region53: #{tpu_custom_call.1} parent=1 // pred_fallthru
      _
    %1783 = vsyncpa [#allocation3], 1
    %1784 = vsyncpa [#allocation6], 1
    %1785 = vsyncpa [#allocation4], 1

</llo_original>
